<compile_context>
chip_gen: v7x
topology: tpu7x:2x2x1
jax: 0.10.0
libtpu: 0.0.40
codegen_flags: <defaults>
</compile_context>

<pallas_src>
import jax
import jax.numpy as jnp
from jax import lax
from jax.experimental import pallas as pl
from jax.experimental.pallas import tpu as pltpu


def add_conv1x1_kernel(a_ref, b_ref, wt_ref, o_ref):
    # a_ref, b_ref: (C_in, P)        f32 activations (P = N*H*W, N == 1)
    # wt_ref:       (C_in, tile_cout) bf16 weight tile (pre-transposed)
    # o_ref:        (P, tile_cout)    f32 — lane-dense (last dim multiple of 128)
    x = (a_ref[...] + b_ref[...]).astype(jnp.bfloat16)   # fused residual add (f32 VPU), cast for MXU
    # Transposed-LHS matmul: contract over C_in (dim 0 of both operands).
    o_ref[...] = lax.dot_general(
        x, wt_ref[...],
        dimension_numbers=(((0,), (0,)), ((), ())),
        preferred_element_type=jnp.float32)               # f32 accumulation on MXU


def prepare_weight(weight):
    """One-time weight preprocessing (outside the hot path): OIHW -> (C_in, C_out) bf16."""
    c_out, c_in = weight.shape[0], weight.shape[1]
    return weight.reshape(c_out, c_in).T.astype(jnp.bfloat16)


def _num_cout_blocks(c_out):
    """2 parallel blocks only on dual-TensorCore chips (v7x); 1 elsewhere."""
    try:
        kind = jax.devices()[0].device_kind.lower()
    except Exception:
        kind = ""
    two_tc = "7" in kind                      # v7x has 2 TensorCores per chip
    if two_tc and c_out % (2 * 128) == 0:
        return 2
    return 1


def add_conv1x1(x458, x443, w_t):
    """x458, x443: NCHW float32 [1, C_in, H, W]; w_t: prepare_weight() output (C_in, C_out) bf16."""
    n, c_in, h, w = x458.shape
    c_out = w_t.shape[1]
    assert n == 1, "kernel specialized for batch 1 (as in the reference module)"
    p = n * h * w

    # NCHW (1,C,H,W) -> (C_in, P): free reshape for N == 1 (no transpose).
    a = x458.reshape(c_in, p)
    b = x443.reshape(c_in, p)

    n_blocks = _num_cout_blocks(c_out)
    tile_cout = c_out // n_blocks

    bytes_accessed = (4 * 2 * c_in * p      # two f32 activations
                      + 2 * c_in * c_out    # bf16 weight
                      + 4 * p * c_out)      # f32 output

    out2d = pl.pallas_call(
        add_conv1x1_kernel,
        out_shape=jax.ShapeDtypeStruct((p, c_out), jnp.float32),
        grid=(n_blocks,),
        in_specs=[
            pl.BlockSpec((c_in, p), lambda j: (0, 0)),          # resident across steps
            pl.BlockSpec((c_in, p), lambda j: (0, 0)),          # resident across steps
            pl.BlockSpec((c_in, tile_cout), lambda j: (0, j)),  # weight tile per block
        ],
        out_specs=pl.BlockSpec((p, tile_cout), lambda j: (0, j)),
        compiler_params=pltpu.CompilerParams(
            dimension_semantics=("parallel",)),
        cost_estimate=pl.CostEstimate(
            flops=2 * p * c_in * c_out,
            transcendentals=0,
            bytes_accessed=bytes_accessed),
    )(a, b, w_t)

    # (P, C_out) -> NCHW [1, C_out, H, W]: small wrapper transpose (301 KB).
    return jnp.transpose(out2d.reshape(h, w, c_out), (2, 0, 1)).reshape(n, c_out, h, w)


if __name__ == "__main__":
    key = jax.random.PRNGKey(0)
    k1, k2, k3 = jax.random.split(key, 3)

    N, C_IN, H, W = 1, 256, 7, 7
    C_OUT = 1536

    x458 = jax.random.normal(k1, (N, C_IN, H, W), dtype=jnp.float32)
    x443 = jax.random.normal(k2, (N, C_IN, H, W), dtype=jnp.float32)
    # Deterministic synthetic conv weight, Conv2d(256, 1536, 1, bias=False)
    weight = jax.random.normal(k3, (C_OUT, C_IN, 1, 1), dtype=jnp.float32) * 0.02

    w_t = prepare_weight(weight)          # one-time bf16 quantize + transpose
    y = add_conv1x1(x458, x443, w_t)
    jax.block_until_ready(y)

    assert y.shape == (N, C_OUT, H, W), y.shape

    # Bit-path reference: same bf16 rounding as the kernel, f32 accumulation.
    xsum_bf = (x458 + x443).astype(jnp.bfloat16).astype(jnp.float32)
    w_bf = weight.reshape(C_OUT, C_IN).astype(jnp.bfloat16).astype(jnp.float32)
    ref_exact = jnp.einsum("nchw,oc->nohw", xsum_bf, w_bf,
                           precision=lax.Precision.HIGHEST)
    assert jnp.allclose(y, ref_exact, atol=1e-4, rtol=1e-4)

    # Module-semantics (full f32) reference — loose tolerance due to the
    # deliberate bf16 weight/activation quantization inside the kernel.
    ref_f32 = jnp.einsum("nchw,oc->nohw", x458 + x443, weight.reshape(C_OUT, C_IN),
                         precision=lax.Precision.HIGHEST)
    assert jnp.allclose(y, ref_f32, atol=3e-2, rtol=3e-2)

    print("KERNEL_OK")
</pallas_src>

<mosaic_0001>
module attributes {stable_mosaic.version = 11 : i64} {
  func.func @add_conv1x1_kernel(%arg0: i32, %arg1: memref<256x49xf32, #tpu.memory_space<vmem>>, %arg2: memref<256x49xf32, #tpu.memory_space<vmem>>, %arg3: memref<256x1536xbf16, #tpu.memory_space<vmem>>, %arg4: memref<49x1536xf32, #tpu.memory_space<vmem>>) attributes {dimension_semantics = [#tpu.dimension_semantics<parallel>], iteration_bounds = array<i64: 1>, scalar_prefetch = 0 : i64, scratch_operands = 0 : i64, tpu.core_type = #tpu.core_type<tc>, window_params = [{pipeline_mode = #tpu.pipeline_mode<synchronous>, transform_indices = @transform_0, window_bounds = array<i64: 256, 49>}, {pipeline_mode = #tpu.pipeline_mode<synchronous>, transform_indices = @transform_1, window_bounds = array<i64: 256, 49>}, {transform_indices = @transform_2, window_bounds = array<i64: 256, 1536>}, {transform_indices = @transform_3, window_bounds = array<i64: 49, 1536>}]} {
    %c0 = arith.constant 0 : index
    %c0_0 = arith.constant 0 : index
    %0 = vector.load %arg1[%c0, %c0_0] : memref<256x49xf32, #tpu.memory_space<vmem>>, vector<256x49xf32>
    %c0_1 = arith.constant 0 : index
    %c0_2 = arith.constant 0 : index
    %1 = vector.load %arg2[%c0_1, %c0_2] : memref<256x49xf32, #tpu.memory_space<vmem>>, vector<256x49xf32>
    %2 = arith.addf %0, %1 : vector<256x49xf32>
    %3 = arith.truncf %2 : vector<256x49xf32> to vector<256x49xbf16>
    %c0_3 = arith.constant 0 : index
    %c0_4 = arith.constant 0 : index
    %4 = vector.load %arg3[%c0_3, %c0_4] : memref<256x1536xbf16, #tpu.memory_space<vmem>>, vector<256x1536xbf16>
    %cst = arith.constant dense<0.000000e+00> : vector<49x1536xf32>
    %5 = tpu.matmul %3, %4, %cst {dimension_numbers = #tpu.dot_dimension_numbers<[0], [0], [1], [1], [0, 1, 1, 1], [], []>} : vector<256x49xbf16>, vector<256x1536xbf16>, vector<49x1536xf32> -> vector<49x1536xf32>
    %c0_5 = arith.constant 0 : index
    %c0_6 = arith.constant 0 : index
    %6 = vector.load %arg4[%c0_5, %c0_6] : memref<49x1536xf32, #tpu.memory_space<vmem>>, vector<49x1536xf32>
    tpu.vector_store %arg4[%c0_5, %c0_6], %5 {strides = array<i32>} : memref<49x1536xf32, #tpu.memory_space<vmem>>, vector<49x1536xf32>,
    return
  }
  func.func @transform_0(%arg0: i32) -> (i32, i32) {
    %c0_i32 = arith.constant 0 : i32
    %c0_i32_0 = arith.constant 0 : i32
    %c0_i32_1 = arith.constant 0 : i32
    return %c0_i32, %c0_i32_0 : i32, i32
  }
  func.func @transform_1(%arg0: i32) -> (i32, i32) {
    %c0_i32 = arith.constant 0 : i32
    %c0_i32_0 = arith.constant 0 : i32
    %c0_i32_1 = arith.constant 0 : i32
    return %c0_i32, %c0_i32_0 : i32, i32
  }
  func.func @transform_2(%arg0: i32) -> (i32, i32) {
    %c0_i32 = arith.constant 0 : i32
    %c0_i32_0 = arith.constant 0 : i32
    return %c0_i32, %arg0 : i32, i32
  }
  func.func @transform_3(%arg0: i32) -> (i32, i32) {
    %c0_i32 = arith.constant 0 : i32
    %c0_i32_0 = arith.constant 0 : i32
    return %c0_i32, %arg0 : i32, i32
  }
}

</mosaic_0001>

<llo_original>
// kernel: tpu_custom_call.1
$region0: #{tpu_custom_call.1}
  #allocation0 [shape = 'u32[]', space=smem, size = 0x4, offset = 0x4, fixed_abs, tag = 'smem constant byte address 0x4 - core index']
  #allocation1 [shape = 'u32[144,128]{1,0:T(1,128)}', space=vmem, size = 0x12000, scoped, tag = 'internal scratch']
  %s0 = inlined_call_operand.vmem [shape: f32[256,49], index: 0, kind: input, shape index: {}]
  %s1 = inlined_call_operand.vmem [shape: f32[256,49], index: 1, kind: input, shape index: {}]
  %s2 = inlined_call_operand.hbm [shape: bf16[256,1536], index: 2, kind: input, shape index: {}]
  %s3 = inlined_call_operand.hbm [shape: f32[49,1536], index: 3, kind: output, shape index: {}]
  %s4 = sld [smem:[#allocation0]]
  $region26: #{tpu_custom_call.1} parent=0
    _
  %s6 = ssub.s32 1, %s4
  %s7 = scalar_select 0, %s6, %s4
  $region1: #{tpu_custom_call.1} parent=0
    #allocation2 [shape = 'u8[786432]{0}', space=vmem, size = 0xc0000, scoped, tag = 'input window, operand 2, single buffered']
    #allocation3 [shape = 's32[1]{0}', space=sflag, size = 0x4, scoped, tag = 'scoped memory for tpu_custom_call.1']
    #allocation4 [shape = 's32[1]{0}', space=sflag, size = 0x4, scoped, tag = 'scoped memory for tpu_custom_call.1']
    #allocation5 [shape = 'u8[344064]{0}', space=vmem, size = 0x54000, scoped, tag = 'output window, operand 0, single buffered']
    %8 = vsyncpa [#allocation3], 0
    %9 = vsyncpa [#allocation4], 0
    // Predicated region
    $region2: #{tpu_custom_call.1} parent=1 // pred_check
      _
    $region3: #{tpu_custom_call.1} parent=1 // pred_check_branch
      %11 = sbr.rel (0) target = $region5
    $region4: #{tpu_custom_call.1} parent=1 // pred_region
      _
    $region5: #{tpu_custom_call.1} parent=1 // pred_fallthru
      _
    // Predicated region
    $region6: #{tpu_custom_call.1} parent=1 // pred_check
      _
    $region7: #{tpu_custom_call.1} parent=1 // pred_check_branch
      %13 = sbr.rel (0) target = $region9
    $region8: #{tpu_custom_call.1} parent=1 // pred_region
      _
    $region9: #{tpu_custom_call.1} parent=1 // pred_fallthru
      _
    // Predicated region
    $region10: #{tpu_custom_call.1} parent=1 // pred_check
      _
    $region11: #{tpu_custom_call.1} parent=1 // pred_check_branch
      %15 = sbr.rel (0) target = $region13
    $region12: #{tpu_custom_call.1} parent=1 // pred_region
      %s17 = ssub.s32 24576, 24576
      %18 = vsyncadd [#allocation3], %s17
      %s19 = sshll.u32 [#allocation2], 4
      %s20 = int_to_ptr.vmem [resolvable:$true] %s19
      %25 = dma.hbm_to_vmem [thread:$0]  %s2, 24576, %s20, [#allocation3], 768, 768, 48
    $region13: #{tpu_custom_call.1} parent=1 // pred_fallthru
      _
    // Predicated region
    $region14: #{tpu_custom_call.1} parent=1 // pred_check
      _
    $region15: #{tpu_custom_call.1} parent=1 // pred_check_branch
      %27 = sbr.rel (0) target = $region17
    $region16: #{tpu_custom_call.1} parent=1 // pred_region
      %28 = dma.done [#allocation3], 24576
    $region17: #{tpu_custom_call.1} parent=1 // pred_fallthru
      _
    %v29 = vld [vmem:[%s0] sm:$0xff]
    %v30 = vld [vmem:[%s0 + $0x8] sm:$0xff]
    %v31 = vld [vmem:[%s0 + $0x10] sm:$0xff]
    %v32 = vld [vmem:[%s0 + $0x18] sm:$0xff]
    %v33 = vld [vmem:[%s0 + $0x20] sm:$0xff]
    %v34 = vld [vmem:[%s0 + $0x28] sm:$0xff]
    %v35 = vld [vmem:[%s0 + $0x30] sm:$0xff]
    %v36 = vld [vmem:[%s0 + $0x38] sm:$0xff]
    %v37 = vld [vmem:[%s0 + $0x40] sm:$0xff]
    %v38 = vld [vmem:[%s0 + $0x48] sm:$0xff]
    %v39 = vld [vmem:[%s0 + $0x50] sm:$0xff]
    %v40 = vld [vmem:[%s0 + $0x58] sm:$0xff]
    %v41 = vld [vmem:[%s0 + $0x60] sm:$0xff]
    %v42 = vld [vmem:[%s0 + $0x68] sm:$0xff]
    %v43 = vld [vmem:[%s0 + $0x70] sm:$0xff]
    %v44 = vld [vmem:[%s0 + $0x78] sm:$0xff]
    %v45 = vld [vmem:[%s0 + $0x80] sm:$0xff]
    %v46 = vld [vmem:[%s0 + $0x88] sm:$0xff]
    %v47 = vld [vmem:[%s0 + $0x90] sm:$0xff]
    %v48 = vld [vmem:[%s0 + $0x98] sm:$0xff]
    %v49 = vld [vmem:[%s0 + $0xa0] sm:$0xff]
    %v50 = vld [vmem:[%s0 + $0xa8] sm:$0xff]
    %v51 = vld [vmem:[%s0 + $0xb0] sm:$0xff]
    %v52 = vld [vmem:[%s0 + $0xb8] sm:$0xff]
    %v53 = vld [vmem:[%s0 + $0xc0] sm:$0xff]
    %v54 = vld [vmem:[%s0 + $0xc8] sm:$0xff]
    %v55 = vld [vmem:[%s0 + $0xd0] sm:$0xff]
    %v56 = vld [vmem:[%s0 + $0xd8] sm:$0xff]
    %v57 = vld [vmem:[%s0 + $0xe0] sm:$0xff]
    %v58 = vld [vmem:[%s0 + $0xe8] sm:$0xff]
    %v59 = vld [vmem:[%s0 + $0xf0] sm:$0xff]
    %v60 = vld [vmem:[%s0 + $0xf8] sm:$0xff]
    %v61 = vld [vmem:[%s1] sm:$0xff]
    %v62 = vld [vmem:[%s1 + $0x8] sm:$0xff]
    %v63 = vld [vmem:[%s1 + $0x10] sm:$0xff]
    %v64 = vld [vmem:[%s1 + $0x18] sm:$0xff]
    %v65 = vld [vmem:[%s1 + $0x20] sm:$0xff]
    %v66 = vld [vmem:[%s1 + $0x28] sm:$0xff]
    %v67 = vld [vmem:[%s1 + $0x30] sm:$0xff]
    %v68 = vld [vmem:[%s1 + $0x38] sm:$0xff]
    %v69 = vld [vmem:[%s1 + $0x40] sm:$0xff]
    %v70 = vld [vmem:[%s1 + $0x48] sm:$0xff]
    %v71 = vld [vmem:[%s1 + $0x50] sm:$0xff]
    %v72 = vld [vmem:[%s1 + $0x58] sm:$0xff]
    %v73 = vld [vmem:[%s1 + $0x60] sm:$0xff]
    %v74 = vld [vmem:[%s1 + $0x68] sm:$0xff]
    %v75 = vld [vmem:[%s1 + $0x70] sm:$0xff]
    %v76 = vld [vmem:[%s1 + $0x78] sm:$0xff]
    %v77 = vld [vmem:[%s1 + $0x80] sm:$0xff]
    %v78 = vld [vmem:[%s1 + $0x88] sm:$0xff]
    %v79 = vld [vmem:[%s1 + $0x90] sm:$0xff]
    %v80 = vld [vmem:[%s1 + $0x98] sm:$0xff]
    %v81 = vld [vmem:[%s1 + $0xa0] sm:$0xff]
    %v82 = vld [vmem:[%s1 + $0xa8] sm:$0xff]
    %v83 = vld [vmem:[%s1 + $0xb0] sm:$0xff]
    %v84 = vld [vmem:[%s1 + $0xb8] sm:$0xff]
    %v85 = vld [vmem:[%s1 + $0xc0] sm:$0xff]
    %v86 = vld [vmem:[%s1 + $0xc8] sm:$0xff]
    %v87 = vld [vmem:[%s1 + $0xd0] sm:$0xff]
    %v88 = vld [vmem:[%s1 + $0xd8] sm:$0xff]
    %v89 = vld [vmem:[%s1 + $0xe0] sm:$0xff]
    %v90 = vld [vmem:[%s1 + $0xe8] sm:$0xff]
    %v91 = vld [vmem:[%s1 + $0xf0] sm:$0xff]
    %v92 = vld [vmem:[%s1 + $0xf8] sm:$0xff]
    %v93 = vadd.f32 %v29, %v61
    %v94 = vadd.f32 %v30, %v62
    %v95 = vadd.f32 %v31, %v63
    %v96 = vadd.f32 %v32, %v64
    %v97 = vadd.f32 %v33, %v65
    %v98 = vadd.f32 %v34, %v66
    %v99 = vadd.f32 %v35, %v67
    %v100 = vadd.f32 %v36, %v68
    %v101 = vadd.f32 %v37, %v69
    %v102 = vadd.f32 %v38, %v70
    %v103 = vadd.f32 %v39, %v71
    %v104 = vadd.f32 %v40, %v72
    %v105 = vadd.f32 %v41, %v73
    %v106 = vadd.f32 %v42, %v74
    %v107 = vadd.f32 %v43, %v75
    %v108 = vadd.f32 %v44, %v76
    %v109 = vadd.f32 %v45, %v77
    %v110 = vadd.f32 %v46, %v78
    %v111 = vadd.f32 %v47, %v79
    %v112 = vadd.f32 %v48, %v80
    %v113 = vadd.f32 %v49, %v81
    %v114 = vadd.f32 %v50, %v82
    %v115 = vadd.f32 %v51, %v83
    %v116 = vadd.f32 %v52, %v84
    %v117 = vadd.f32 %v53, %v85
    %v118 = vadd.f32 %v54, %v86
    %v119 = vadd.f32 %v55, %v87
    %v120 = vadd.f32 %v56, %v88
    %v121 = vadd.f32 %v57, %v89
    %v122 = vadd.f32 %v58, %v90
    %v123 = vadd.f32 %v59, %v91
    %v124 = vadd.f32 %v60, %v92
    %v125 = vpack.c.bf16 %v94, %v93
    %v126 = vpack.c.bf16 %v96, %v95
    %v127 = vpack.c.bf16 %v98, %v97
    %v128 = vpack.c.bf16 %v100, %v99
    %v129 = vpack.c.bf16 %v102, %v101
    %v130 = vpack.c.bf16 %v104, %v103
    %v131 = vpack.c.bf16 %v106, %v105
    %v132 = vpack.c.bf16 %v108, %v107
    %v133 = vpack.c.bf16 %v110, %v109
    %v134 = vpack.c.bf16 %v112, %v111
    %v135 = vpack.c.bf16 %v114, %v113
    %v136 = vpack.c.bf16 %v116, %v115
    %v137 = vpack.c.bf16 %v118, %v117
    %v138 = vpack.c.bf16 %v120, %v119
    %v139 = vpack.c.bf16 %v122, %v121
    %v140 = vpack.c.bf16 %v124, %v123
    %v141 = vld [vmem:[#allocation2] sm:$0xff]
    %v142 = vld [vmem:[#allocation2 + $0x8] sm:$0xff]
    %v143 = vld [vmem:[#allocation2 + $0x10] sm:$0xff]
    %v144 = vld [vmem:[#allocation2 + $0x18] sm:$0xff]
    %v145 = vld [vmem:[#allocation2 + $0x20] sm:$0xff]
    %v146 = vld [vmem:[#allocation2 + $0x28] sm:$0xff]
    %v147 = vld [vmem:[#allocation2 + $0x30] sm:$0xff]
    %v148 = vld [vmem:[#allocation2 + $0x38] sm:$0xff]
    %v149 = vld [vmem:[#allocation2 + $0x40] sm:$0xff]
    %v150 = vld [vmem:[#allocation2 + $0x48] sm:$0xff]
    %v151 = vld [vmem:[#allocation2 + $0x50] sm:$0xff]
    %v152 = vld [vmem:[#allocation2 + $0x58] sm:$0xff]
    %v153 = vld [vmem:[#allocation2 + $0x60] sm:$0xff]
    %v154 = vld [vmem:[#allocation2 + $0x68] sm:$0xff]
    %v155 = vld [vmem:[#allocation2 + $0x70] sm:$0xff]
    %v156 = vld [vmem:[#allocation2 + $0x78] sm:$0xff]
    %v157 = vld [vmem:[#allocation2 + $0x80] sm:$0xff]
    %v158 = vld [vmem:[#allocation2 + $0x88] sm:$0xff]
    %v159 = vld [vmem:[#allocation2 + $0x90] sm:$0xff]
    %v160 = vld [vmem:[#allocation2 + $0x98] sm:$0xff]
    %v161 = vld [vmem:[#allocation2 + $0xa0] sm:$0xff]
    %v162 = vld [vmem:[#allocation2 + $0xa8] sm:$0xff]
    %v163 = vld [vmem:[#allocation2 + $0xb0] sm:$0xff]
    %v164 = vld [vmem:[#allocation2 + $0xb8] sm:$0xff]
    %v165 = vld [vmem:[#allocation2 + $0xc0] sm:$0xff]
    %v166 = vld [vmem:[#allocation2 + $0xc8] sm:$0xff]
    %v167 = vld [vmem:[#allocation2 + $0xd0] sm:$0xff]
    %v168 = vld [vmem:[#allocation2 + $0xd8] sm:$0xff]
    %v169 = vld [vmem:[#allocation2 + $0xe0] sm:$0xff]
    %v170 = vld [vmem:[#allocation2 + $0xe8] sm:$0xff]
    %v171 = vld [vmem:[#allocation2 + $0xf0] sm:$0xff]
    %v172 = vld [vmem:[#allocation2 + $0xf8] sm:$0xff]
    %v173 = vld [vmem:[#allocation2 + $0x100] sm:$0xff]
    %v174 = vld [vmem:[#allocation2 + $0x108] sm:$0xff]
    %v175 = vld [vmem:[#allocation2 + $0x110] sm:$0xff]
    %v176 = vld [vmem:[#allocation2 + $0x118] sm:$0xff]
    %v177 = vld [vmem:[#allocation2 + $0x120] sm:$0xff]
    %v178 = vld [vmem:[#allocation2 + $0x128] sm:$0xff]
    %v179 = vld [vmem:[#allocation2 + $0x130] sm:$0xff]
    %v180 = vld [vmem:[#allocation2 + $0x138] sm:$0xff]
    %v181 = vld [vmem:[#allocation2 + $0x140] sm:$0xff]
    %v182 = vld [vmem:[#allocation2 + $0x148] sm:$0xff]
    %v183 = vld [vmem:[#allocation2 + $0x150] sm:$0xff]
    %v184 = vld [vmem:[#allocation2 + $0x158] sm:$0xff]
    %v185 = vld [vmem:[#allocation2 + $0x160] sm:$0xff]
    %v186 = vld [vmem:[#allocation2 + $0x168] sm:$0xff]
    %v187 = vld [vmem:[#allocation2 + $0x170] sm:$0xff]
    %v188 = vld [vmem:[#allocation2 + $0x178] sm:$0xff]
    %v189 = vld [vmem:[#allocation2 + $0x180] sm:$0xff]
    %v190 = vld [vmem:[#allocation2 + $0x188] sm:$0xff]
    %v191 = vld [vmem:[#allocation2 + $0x190] sm:$0xff]
    %v192 = vld [vmem:[#allocation2 + $0x198] sm:$0xff]
    %v193 = vld [vmem:[#allocation2 + $0x1a0] sm:$0xff]
    %v194 = vld [vmem:[#allocation2 + $0x1a8] sm:$0xff]
    %v195 = vld [vmem:[#allocation2 + $0x1b0] sm:$0xff]
    %v196 = vld [vmem:[#allocation2 + $0x1b8] sm:$0xff]
    %v197 = vld [vmem:[#allocation2 + $0x1c0] sm:$0xff]
    %v198 = vld [vmem:[#allocation2 + $0x1c8] sm:$0xff]
    %v199 = vld [vmem:[#allocation2 + $0x1d0] sm:$0xff]
    %v200 = vld [vmem:[#allocation2 + $0x1d8] sm:$0xff]
    %v201 = vld [vmem:[#allocation2 + $0x1e0] sm:$0xff]
    %v202 = vld [vmem:[#allocation2 + $0x1e8] sm:$0xff]
    %v203 = vld [vmem:[#allocation2 + $0x1f0] sm:$0xff]
    %v204 = vld [vmem:[#allocation2 + $0x1f8] sm:$0xff]
    %v205 = vld [vmem:[#allocation2 + $0x200] sm:$0xff]
    %v206 = vld [vmem:[#allocation2 + $0x208] sm:$0xff]
    %v207 = vld [vmem:[#allocation2 + $0x210] sm:$0xff]
    %v208 = vld [vmem:[#allocation2 + $0x218] sm:$0xff]
    %v209 = vld [vmem:[#allocation2 + $0x220] sm:$0xff]
    %v210 = vld [vmem:[#allocation2 + $0x228] sm:$0xff]
    %v211 = vld [vmem:[#allocation2 + $0x230] sm:$0xff]
    %v212 = vld [vmem:[#allocation2 + $0x238] sm:$0xff]
    %v213 = vld [vmem:[#allocation2 + $0x240] sm:$0xff]
    %v214 = vld [vmem:[#allocation2 + $0x248] sm:$0xff]
    %v215 = vld [vmem:[#allocation2 + $0x250] sm:$0xff]
    %v216 = vld [vmem:[#allocation2 + $0x258] sm:$0xff]
    %v217 = vld [vmem:[#allocation2 + $0x260] sm:$0xff]
    %v218 = vld [vmem:[#allocation2 + $0x268] sm:$0xff]
    %v219 = vld [vmem:[#allocation2 + $0x270] sm:$0xff]
    %v220 = vld [vmem:[#allocation2 + $0x278] sm:$0xff]
    %v221 = vld [vmem:[#allocation2 + $0x280] sm:$0xff]
    %v222 = vld [vmem:[#allocation2 + $0x288] sm:$0xff]
    %v223 = vld [vmem:[#allocation2 + $0x290] sm:$0xff]
    %v224 = vld [vmem:[#allocation2 + $0x298] sm:$0xff]
    %v225 = vld [vmem:[#allocation2 + $0x2a0] sm:$0xff]
    %v226 = vld [vmem:[#allocation2 + $0x2a8] sm:$0xff]
    %v227 = vld [vmem:[#allocation2 + $0x2b0] sm:$0xff]
    %v228 = vld [vmem:[#allocation2 + $0x2b8] sm:$0xff]
    %v229 = vld [vmem:[#allocation2 + $0x2c0] sm:$0xff]
    %v230 = vld [vmem:[#allocation2 + $0x2c8] sm:$0xff]
    %v231 = vld [vmem:[#allocation2 + $0x2d0] sm:$0xff]
    %v232 = vld [vmem:[#allocation2 + $0x2d8] sm:$0xff]
    %v233 = vld [vmem:[#allocation2 + $0x2e0] sm:$0xff]
    %v234 = vld [vmem:[#allocation2 + $0x2e8] sm:$0xff]
    %v235 = vld [vmem:[#allocation2 + $0x2f0] sm:$0xff]
    %v236 = vld [vmem:[#allocation2 + $0x2f8] sm:$0xff]
    %v237 = vld [vmem:[#allocation2 + $0x300] sm:$0xff]
    %v238 = vld [vmem:[#allocation2 + $0x308] sm:$0xff]
    %v239 = vld [vmem:[#allocation2 + $0x310] sm:$0xff]
    %v240 = vld [vmem:[#allocation2 + $0x318] sm:$0xff]
    %v241 = vld [vmem:[#allocation2 + $0x320] sm:$0xff]
    %v242 = vld [vmem:[#allocation2 + $0x328] sm:$0xff]
    %v243 = vld [vmem:[#allocation2 + $0x330] sm:$0xff]
    %v244 = vld [vmem:[#allocation2 + $0x338] sm:$0xff]
    %v245 = vld [vmem:[#allocation2 + $0x340] sm:$0xff]
    %v246 = vld [vmem:[#allocation2 + $0x348] sm:$0xff]
    %v247 = vld [vmem:[#allocation2 + $0x350] sm:$0xff]
    %v248 = vld [vmem:[#allocation2 + $0x358] sm:$0xff]
    %v249 = vld [vmem:[#allocation2 + $0x360] sm:$0xff]
    %v250 = vld [vmem:[#allocation2 + $0x368] sm:$0xff]
    %v251 = vld [vmem:[#allocation2 + $0x370] sm:$0xff]
    %v252 = vld [vmem:[#allocation2 + $0x378] sm:$0xff]
    %v253 = vld [vmem:[#allocation2 + $0x380] sm:$0xff]
    %v254 = vld [vmem:[#allocation2 + $0x388] sm:$0xff]
    %v255 = vld [vmem:[#allocation2 + $0x390] sm:$0xff]
    %v256 = vld [vmem:[#allocation2 + $0x398] sm:$0xff]
    %v257 = vld [vmem:[#allocation2 + $0x3a0] sm:$0xff]
    %v258 = vld [vmem:[#allocation2 + $0x3a8] sm:$0xff]
    %v259 = vld [vmem:[#allocation2 + $0x3b0] sm:$0xff]
    %v260 = vld [vmem:[#allocation2 + $0x3b8] sm:$0xff]
    %v261 = vld [vmem:[#allocation2 + $0x3c0] sm:$0xff]
    %v262 = vld [vmem:[#allocation2 + $0x3c8] sm:$0xff]
    %v263 = vld [vmem:[#allocation2 + $0x3d0] sm:$0xff]
    %v264 = vld [vmem:[#allocation2 + $0x3d8] sm:$0xff]
    %v265 = vld [vmem:[#allocation2 + $0x3e0] sm:$0xff]
    %v266 = vld [vmem:[#allocation2 + $0x3e8] sm:$0xff]
    %v267 = vld [vmem:[#allocation2 + $0x3f0] sm:$0xff]
    %v268 = vld [vmem:[#allocation2 + $0x3f8] sm:$0xff]
    %v269 = vld [vmem:[#allocation2 + $0x400] sm:$0xff]
    %v270 = vld [vmem:[#allocation2 + $0x408] sm:$0xff]
    %v271 = vld [vmem:[#allocation2 + $0x410] sm:$0xff]
    %v272 = vld [vmem:[#allocation2 + $0x418] sm:$0xff]
    %v273 = vld [vmem:[#allocation2 + $0x420] sm:$0xff]
    %v274 = vld [vmem:[#allocation2 + $0x428] sm:$0xff]
    %v275 = vld [vmem:[#allocation2 + $0x430] sm:$0xff]
    %v276 = vld [vmem:[#allocation2 + $0x438] sm:$0xff]
    %v277 = vld [vmem:[#allocation2 + $0x440] sm:$0xff]
    %v278 = vld [vmem:[#allocation2 + $0x448] sm:$0xff]
    %v279 = vld [vmem:[#allocation2 + $0x450] sm:$0xff]
    %v280 = vld [vmem:[#allocation2 + $0x458] sm:$0xff]
    %v281 = vld [vmem:[#allocation2 + $0x460] sm:$0xff]
    %v282 = vld [vmem:[#allocation2 + $0x468] sm:$0xff]
    %v283 = vld [vmem:[#allocation2 + $0x470] sm:$0xff]
    %v284 = vld [vmem:[#allocation2 + $0x478] sm:$0xff]
    %v285 = vld [vmem:[#allocation2 + $0x480] sm:$0xff]
    %v286 = vld [vmem:[#allocation2 + $0x488] sm:$0xff]
    %v287 = vld [vmem:[#allocation2 + $0x490] sm:$0xff]
    %v288 = vld [vmem:[#allocation2 + $0x498] sm:$0xff]
    %v289 = vld [vmem:[#allocation2 + $0x4a0] sm:$0xff]
    %v290 = vld [vmem:[#allocation2 + $0x4a8] sm:$0xff]
    %v291 = vld [vmem:[#allocation2 + $0x4b0] sm:$0xff]
    %v292 = vld [vmem:[#allocation2 + $0x4b8] sm:$0xff]
    %v293 = vld [vmem:[#allocation2 + $0x4c0] sm:$0xff]
    %v294 = vld [vmem:[#allocation2 + $0x4c8] sm:$0xff]
    %v295 = vld [vmem:[#allocation2 + $0x4d0] sm:$0xff]
    %v296 = vld [vmem:[#allocation2 + $0x4d8] sm:$0xff]
    %v297 = vld [vmem:[#allocation2 + $0x4e0] sm:$0xff]
    %v298 = vld [vmem:[#allocation2 + $0x4e8] sm:$0xff]
    %v299 = vld [vmem:[#allocation2 + $0x4f0] sm:$0xff]
    %v300 = vld [vmem:[#allocation2 + $0x4f8] sm:$0xff]
    %v301 = vld [vmem:[#allocation2 + $0x500] sm:$0xff]
    %v302 = vld [vmem:[#allocation2 + $0x508] sm:$0xff]
    %v303 = vld [vmem:[#allocation2 + $0x510] sm:$0xff]
    %v304 = vld [vmem:[#allocation2 + $0x518] sm:$0xff]
    %v305 = vld [vmem:[#allocation2 + $0x520] sm:$0xff]
    %v306 = vld [vmem:[#allocation2 + $0x528] sm:$0xff]
    %v307 = vld [vmem:[#allocation2 + $0x530] sm:$0xff]
    %v308 = vld [vmem:[#allocation2 + $0x538] sm:$0xff]
    %v309 = vld [vmem:[#allocation2 + $0x540] sm:$0xff]
    %v310 = vld [vmem:[#allocation2 + $0x548] sm:$0xff]
    %v311 = vld [vmem:[#allocation2 + $0x550] sm:$0xff]
    %v312 = vld [vmem:[#allocation2 + $0x558] sm:$0xff]
    %v313 = vld [vmem:[#allocation2 + $0x560] sm:$0xff]
    %v314 = vld [vmem:[#allocation2 + $0x568] sm:$0xff]
    %v315 = vld [vmem:[#allocation2 + $0x570] sm:$0xff]
    %v316 = vld [vmem:[#allocation2 + $0x578] sm:$0xff]
    %v317 = vld [vmem:[#allocation2 + $0x580] sm:$0xff]
    %v318 = vld [vmem:[#allocation2 + $0x588] sm:$0xff]
    %v319 = vld [vmem:[#allocation2 + $0x590] sm:$0xff]
    %v320 = vld [vmem:[#allocation2 + $0x598] sm:$0xff]
    %v321 = vld [vmem:[#allocation2 + $0x5a0] sm:$0xff]
    %v322 = vld [vmem:[#allocation2 + $0x5a8] sm:$0xff]
    %v323 = vld [vmem:[#allocation2 + $0x5b0] sm:$0xff]
    %v324 = vld [vmem:[#allocation2 + $0x5b8] sm:$0xff]
    %v325 = vld [vmem:[#allocation2 + $0x5c0] sm:$0xff]
    %v326 = vld [vmem:[#allocation2 + $0x5c8] sm:$0xff]
    %v327 = vld [vmem:[#allocation2 + $0x5d0] sm:$0xff]
    %v328 = vld [vmem:[#allocation2 + $0x5d8] sm:$0xff]
    %v329 = vld [vmem:[#allocation2 + $0x5e0] sm:$0xff]
    %v330 = vld [vmem:[#allocation2 + $0x5e8] sm:$0xff]
    %v331 = vld [vmem:[#allocation2 + $0x5f0] sm:$0xff]
    %v332 = vld [vmem:[#allocation2 + $0x5f8] sm:$0xff]
    %333 = vxpose.xlu0.c.b16.start [1/8] %v125, 128
    %334 = vxpose.xlu0.c.b16.cont [2/8] %v126, 128
    %335 = vxpose.xlu0.c.b16.cont [3/8] %v127, 128
    %336 = vxpose.xlu0.c.b16.cont [4/8] %v128, 128
    %337 = vxpose.xlu0.c.b16.cont [5/8] %v129, 128
    %338 = vxpose.xlu0.c.b16.cont [6/8] %v130, 128
    %339 = vxpose.xlu0.c.b16.cont [7/8] %v131, 128
    %340 = vxpose.xlu0.c.b16.end [8/8] %v132, 128
    %v341 = vpop.trf.xlu0
    %v342 = vpop.trf.xlu0
    %v343 = vpop.trf.xlu0
    %v344 = vpop.trf.xlu0
    %v345 = vpop.trf.xlu0
    %v346 = vpop.trf.xlu0
    %v347 = vpop.trf.xlu0
    %v348 = vpop.trf.xlu0
    %349 = vxpose.xlu0.c.b16.start [1/8] %v133, 128
    %350 = vxpose.xlu0.c.b16.cont [2/8] %v134, 128
    %351 = vxpose.xlu0.c.b16.cont [3/8] %v135, 128
    %352 = vxpose.xlu0.c.b16.cont [4/8] %v136, 128
    %353 = vxpose.xlu0.c.b16.cont [5/8] %v137, 128
    %354 = vxpose.xlu0.c.b16.cont [6/8] %v138, 128
    %355 = vxpose.xlu0.c.b16.cont [7/8] %v139, 128
    %356 = vxpose.xlu0.c.b16.end [8/8] %v140, 128
    %v357 = vpop.trf.xlu0
    %v358 = vpop.trf.xlu0
    %v359 = vpop.trf.xlu0
    %v360 = vpop.trf.xlu0
    %v361 = vpop.trf.xlu0
    %v362 = vpop.trf.xlu0
    %v363 = vpop.trf.xlu0
    %v364 = vpop.trf.xlu0
    %v557 = vunpack.c.l.b16 %v141
    %v558 = vunpack.c.h.b16 %v141
    %v559 = vunpack.c.l.b16 %v142
    %v560 = vunpack.c.h.b16 %v142
    %v561 = vunpack.c.l.b16 %v143
    %v562 = vunpack.c.h.b16 %v143
    %v563 = vunpack.c.l.b16 %v144
    %v564 = vunpack.c.h.b16 %v144
    %v565 = vunpack.c.l.b16 %v145
    %v566 = vunpack.c.h.b16 %v145
    %v567 = vunpack.c.l.b16 %v146
    %v568 = vunpack.c.h.b16 %v146
    %v569 = vunpack.c.l.b16 %v147
    %v570 = vunpack.c.h.b16 %v147
    %v571 = vunpack.c.l.b16 %v148
    %v572 = vunpack.c.h.b16 %v148
    %v573 = vunpack.c.l.b16 %v149
    %v574 = vunpack.c.h.b16 %v149
    %v575 = vunpack.c.l.b16 %v150
    %v576 = vunpack.c.h.b16 %v150
    %v577 = vunpack.c.l.b16 %v151
    %v578 = vunpack.c.h.b16 %v151
    %v579 = vunpack.c.l.b16 %v152
    %v580 = vunpack.c.h.b16 %v152
    %v581 = vunpack.c.l.b16 %v153
    %v582 = vunpack.c.h.b16 %v153
    %v583 = vunpack.c.l.b16 %v154
    %v584 = vunpack.c.h.b16 %v154
    %v585 = vunpack.c.l.b16 %v155
    %v586 = vunpack.c.h.b16 %v155
    %v587 = vunpack.c.l.b16 %v156
    %v588 = vunpack.c.h.b16 %v156
    %v589 = vunpack.c.l.b16 %v157
    %v590 = vunpack.c.h.b16 %v157
    %v591 = vunpack.c.l.b16 %v158
    %v592 = vunpack.c.h.b16 %v158
    %v593 = vunpack.c.l.b16 %v159
    %v594 = vunpack.c.h.b16 %v159
    %v595 = vunpack.c.l.b16 %v160
    %v596 = vunpack.c.h.b16 %v160
    %v597 = vunpack.c.l.b16 %v161
    %v598 = vunpack.c.h.b16 %v161
    %v599 = vunpack.c.l.b16 %v162
    %v600 = vunpack.c.h.b16 %v162
    %v601 = vunpack.c.l.b16 %v163
    %v602 = vunpack.c.h.b16 %v163
    %v603 = vunpack.c.l.b16 %v164
    %v604 = vunpack.c.h.b16 %v164
    %v605 = vunpack.c.l.b16 %v165
    %v606 = vunpack.c.h.b16 %v165
    %v607 = vunpack.c.l.b16 %v166
    %v608 = vunpack.c.h.b16 %v166
    %v609 = vunpack.c.l.b16 %v167
    %v610 = vunpack.c.h.b16 %v167
    %v611 = vunpack.c.l.b16 %v168
    %v612 = vunpack.c.h.b16 %v168
    %v613 = vunpack.c.l.b16 %v169
    %v614 = vunpack.c.h.b16 %v169
    %v615 = vunpack.c.l.b16 %v170
    %v616 = vunpack.c.h.b16 %v170
    %v617 = vunpack.c.l.b16 %v171
    %v618 = vunpack.c.h.b16 %v171
    %v619 = vunpack.c.l.b16 %v172
    %v620 = vunpack.c.h.b16 %v172
    %v621 = vunpack.c.l.b16 %v173
    %v622 = vunpack.c.h.b16 %v173
    %v623 = vunpack.c.l.b16 %v174
    %v624 = vunpack.c.h.b16 %v174
    %v625 = vunpack.c.l.b16 %v175
    %v626 = vunpack.c.h.b16 %v175
    %v627 = vunpack.c.l.b16 %v176
    %v628 = vunpack.c.h.b16 %v176
    %v629 = vunpack.c.l.b16 %v177
    %v630 = vunpack.c.h.b16 %v177
    %v631 = vunpack.c.l.b16 %v178
    %v632 = vunpack.c.h.b16 %v178
    %v633 = vunpack.c.l.b16 %v179
    %v634 = vunpack.c.h.b16 %v179
    %v635 = vunpack.c.l.b16 %v180
    %v636 = vunpack.c.h.b16 %v180
    %v637 = vunpack.c.l.b16 %v181
    %v638 = vunpack.c.h.b16 %v181
    %v639 = vunpack.c.l.b16 %v182
    %v640 = vunpack.c.h.b16 %v182
    %v641 = vunpack.c.l.b16 %v183
    %v642 = vunpack.c.h.b16 %v183
    %v643 = vunpack.c.l.b16 %v184
    %v644 = vunpack.c.h.b16 %v184
    %v645 = vunpack.c.l.b16 %v185
    %v646 = vunpack.c.h.b16 %v185
    %v647 = vunpack.c.l.b16 %v186
    %v648 = vunpack.c.h.b16 %v186
    %v649 = vunpack.c.l.b16 %v187
    %v650 = vunpack.c.h.b16 %v187
    %v651 = vunpack.c.l.b16 %v188
    %v652 = vunpack.c.h.b16 %v188
    %v653 = vunpack.c.l.b16 %v189
    %v654 = vunpack.c.h.b16 %v189
    %v655 = vunpack.c.l.b16 %v190
    %v656 = vunpack.c.h.b16 %v190
    %v657 = vunpack.c.l.b16 %v191
    %v658 = vunpack.c.h.b16 %v191
    %v659 = vunpack.c.l.b16 %v192
    %v660 = vunpack.c.h.b16 %v192
    %v661 = vunpack.c.l.b16 %v193
    %v662 = vunpack.c.h.b16 %v193
    %v663 = vunpack.c.l.b16 %v194
    %v664 = vunpack.c.h.b16 %v194
    %v665 = vunpack.c.l.b16 %v195
    %v666 = vunpack.c.h.b16 %v195
    %v667 = vunpack.c.l.b16 %v196
    %v668 = vunpack.c.h.b16 %v196
    %v669 = vunpack.c.l.b16 %v197
    %v670 = vunpack.c.h.b16 %v197
    %v671 = vunpack.c.l.b16 %v198
    %v672 = vunpack.c.h.b16 %v198
    %v673 = vunpack.c.l.b16 %v199
    %v674 = vunpack.c.h.b16 %v199
    %v675 = vunpack.c.l.b16 %v200
    %v676 = vunpack.c.h.b16 %v200
    %v677 = vunpack.c.l.b16 %v201
    %v678 = vunpack.c.h.b16 %v201
    %v679 = vunpack.c.l.b16 %v202
    %v680 = vunpack.c.h.b16 %v202
    %v681 = vunpack.c.l.b16 %v203
    %v682 = vunpack.c.h.b16 %v203
    %v683 = vunpack.c.l.b16 %v204
    %v684 = vunpack.c.h.b16 %v204
    %v685 = vunpack.c.l.b16 %v205
    %v686 = vunpack.c.h.b16 %v205
    %v687 = vunpack.c.l.b16 %v206
    %v688 = vunpack.c.h.b16 %v206
    %v689 = vunpack.c.l.b16 %v207
    %v690 = vunpack.c.h.b16 %v207
    %v691 = vunpack.c.l.b16 %v208
    %v692 = vunpack.c.h.b16 %v208
    %v693 = vunpack.c.l.b16 %v209
    %v694 = vunpack.c.h.b16 %v209
    %v695 = vunpack.c.l.b16 %v210
    %v696 = vunpack.c.h.b16 %v210
    %v697 = vunpack.c.l.b16 %v211
    %v698 = vunpack.c.h.b16 %v211
    %v699 = vunpack.c.l.b16 %v212
    %v700 = vunpack.c.h.b16 %v212
    %v701 = vunpack.c.l.b16 %v213
    %v702 = vunpack.c.h.b16 %v213
    %v703 = vunpack.c.l.b16 %v214
    %v704 = vunpack.c.h.b16 %v214
    %v705 = vunpack.c.l.b16 %v215
    %v706 = vunpack.c.h.b16 %v215
    %v707 = vunpack.c.l.b16 %v216
    %v708 = vunpack.c.h.b16 %v216
    %v709 = vunpack.c.l.b16 %v217
    %v710 = vunpack.c.h.b16 %v217
    %v711 = vunpack.c.l.b16 %v218
    %v712 = vunpack.c.h.b16 %v218
    %v713 = vunpack.c.l.b16 %v219
    %v714 = vunpack.c.h.b16 %v219
    %v715 = vunpack.c.l.b16 %v220
    %v716 = vunpack.c.h.b16 %v220
    %v717 = vunpack.c.l.b16 %v221
    %v718 = vunpack.c.h.b16 %v221
    %v719 = vunpack.c.l.b16 %v222
    %v720 = vunpack.c.h.b16 %v222
    %v721 = vunpack.c.l.b16 %v223
    %v722 = vunpack.c.h.b16 %v223
    %v723 = vunpack.c.l.b16 %v224
    %v724 = vunpack.c.h.b16 %v224
    %v725 = vunpack.c.l.b16 %v225
    %v726 = vunpack.c.h.b16 %v225
    %v727 = vunpack.c.l.b16 %v226
    %v728 = vunpack.c.h.b16 %v226
    %v729 = vunpack.c.l.b16 %v227
    %v730 = vunpack.c.h.b16 %v227
    %v731 = vunpack.c.l.b16 %v228
    %v732 = vunpack.c.h.b16 %v228
    %v733 = vunpack.c.l.b16 %v229
    %v734 = vunpack.c.h.b16 %v229
    %v735 = vunpack.c.l.b16 %v230
    %v736 = vunpack.c.h.b16 %v230
    %v737 = vunpack.c.l.b16 %v231
    %v738 = vunpack.c.h.b16 %v231
    %v739 = vunpack.c.l.b16 %v232
    %v740 = vunpack.c.h.b16 %v232
    %v741 = vunpack.c.l.b16 %v233
    %v742 = vunpack.c.h.b16 %v233
    %v743 = vunpack.c.l.b16 %v234
    %v744 = vunpack.c.h.b16 %v234
    %v745 = vunpack.c.l.b16 %v235
    %v746 = vunpack.c.h.b16 %v235
    %v747 = vunpack.c.l.b16 %v236
    %v748 = vunpack.c.h.b16 %v236
    %v749 = vunpack.c.l.b16 %v237
    %v750 = vunpack.c.h.b16 %v237
    %v751 = vunpack.c.l.b16 %v238
    %v752 = vunpack.c.h.b16 %v238
    %v753 = vunpack.c.l.b16 %v239
    %v754 = vunpack.c.h.b16 %v239
    %v755 = vunpack.c.l.b16 %v240
    %v756 = vunpack.c.h.b16 %v240
    %v757 = vunpack.c.l.b16 %v241
    %v758 = vunpack.c.h.b16 %v241
    %v759 = vunpack.c.l.b16 %v242
    %v760 = vunpack.c.h.b16 %v242
    %v761 = vunpack.c.l.b16 %v243
    %v762 = vunpack.c.h.b16 %v243
    %v763 = vunpack.c.l.b16 %v244
    %v764 = vunpack.c.h.b16 %v244
    %v765 = vunpack.c.l.b16 %v245
    %v766 = vunpack.c.h.b16 %v245
    %v767 = vunpack.c.l.b16 %v246
    %v768 = vunpack.c.h.b16 %v246
    %v769 = vunpack.c.l.b16 %v247
    %v770 = vunpack.c.h.b16 %v247
    %v771 = vunpack.c.l.b16 %v248
    %v772 = vunpack.c.h.b16 %v248
    %v773 = vunpack.c.l.b16 %v249
    %v774 = vunpack.c.h.b16 %v249
    %v775 = vunpack.c.l.b16 %v250
    %v776 = vunpack.c.h.b16 %v250
    %v777 = vunpack.c.l.b16 %v251
    %v778 = vunpack.c.h.b16 %v251
    %v779 = vunpack.c.l.b16 %v252
    %v780 = vunpack.c.h.b16 %v252
    %v781 = vunpack.c.l.b16 %v253
    %v782 = vunpack.c.h.b16 %v253
    %v783 = vunpack.c.l.b16 %v254
    %v784 = vunpack.c.h.b16 %v254
    %v785 = vunpack.c.l.b16 %v255
    %v786 = vunpack.c.h.b16 %v255
    %v787 = vunpack.c.l.b16 %v256
    %v788 = vunpack.c.h.b16 %v256
    %v789 = vunpack.c.l.b16 %v257
    %v790 = vunpack.c.h.b16 %v257
    %v791 = vunpack.c.l.b16 %v258
    %v792 = vunpack.c.h.b16 %v258
    %v793 = vunpack.c.l.b16 %v259
    %v794 = vunpack.c.h.b16 %v259
    %v795 = vunpack.c.l.b16 %v260
    %v796 = vunpack.c.h.b16 %v260
    %v797 = vunpack.c.l.b16 %v261
    %v798 = vunpack.c.h.b16 %v261
    %v799 = vunpack.c.l.b16 %v262
    %v800 = vunpack.c.h.b16 %v262
    %v801 = vunpack.c.l.b16 %v263
    %v802 = vunpack.c.h.b16 %v263
    %v803 = vunpack.c.l.b16 %v264
    %v804 = vunpack.c.h.b16 %v264
    %v805 = vunpack.c.l.b16 %v265
    %v806 = vunpack.c.h.b16 %v265
    %v807 = vunpack.c.l.b16 %v266
    %v808 = vunpack.c.h.b16 %v266
    %v809 = vunpack.c.l.b16 %v267
    %v810 = vunpack.c.h.b16 %v267
    %v811 = vunpack.c.l.b16 %v268
    %v812 = vunpack.c.h.b16 %v268
    %v813 = vunpack.c.l.b16 %v269
    %v814 = vunpack.c.h.b16 %v269
    %v815 = vunpack.c.l.b16 %v270
    %v816 = vunpack.c.h.b16 %v270
    %v817 = vunpack.c.l.b16 %v271
    %v818 = vunpack.c.h.b16 %v271
    %v819 = vunpack.c.l.b16 %v272
    %v820 = vunpack.c.h.b16 %v272
    %v821 = vunpack.c.l.b16 %v273
    %v822 = vunpack.c.h.b16 %v273
    %v823 = vunpack.c.l.b16 %v274
    %v824 = vunpack.c.h.b16 %v274
    %v825 = vunpack.c.l.b16 %v275
    %v826 = vunpack.c.h.b16 %v275
    %v827 = vunpack.c.l.b16 %v276
    %v828 = vunpack.c.h.b16 %v276
    %v829 = vunpack.c.l.b16 %v277
    %v830 = vunpack.c.h.b16 %v277
    %v831 = vunpack.c.l.b16 %v278
    %v832 = vunpack.c.h.b16 %v278
    %v833 = vunpack.c.l.b16 %v279
    %v834 = vunpack.c.h.b16 %v279
    %v835 = vunpack.c.l.b16 %v280
    %v836 = vunpack.c.h.b16 %v280
    %v837 = vunpack.c.l.b16 %v281
    %v838 = vunpack.c.h.b16 %v281
    %v839 = vunpack.c.l.b16 %v282
    %v840 = vunpack.c.h.b16 %v282
    %v841 = vunpack.c.l.b16 %v283
    %v842 = vunpack.c.h.b16 %v283
    %v843 = vunpack.c.l.b16 %v284
    %v844 = vunpack.c.h.b16 %v284
    %v845 = vunpack.c.l.b16 %v285
    %v846 = vunpack.c.h.b16 %v285
    %v847 = vunpack.c.l.b16 %v286
    %v848 = vunpack.c.h.b16 %v286
    %v849 = vunpack.c.l.b16 %v287
    %v850 = vunpack.c.h.b16 %v287
    %v851 = vunpack.c.l.b16 %v288
    %v852 = vunpack.c.h.b16 %v288
    %v853 = vunpack.c.l.b16 %v289
    %v854 = vunpack.c.h.b16 %v289
    %v855 = vunpack.c.l.b16 %v290
    %v856 = vunpack.c.h.b16 %v290
    %v857 = vunpack.c.l.b16 %v291
    %v858 = vunpack.c.h.b16 %v291
    %v859 = vunpack.c.l.b16 %v292
    %v860 = vunpack.c.h.b16 %v292
    %v861 = vunpack.c.l.b16 %v293
    %v862 = vunpack.c.h.b16 %v293
    %v863 = vunpack.c.l.b16 %v294
    %v864 = vunpack.c.h.b16 %v294
    %v865 = vunpack.c.l.b16 %v295
    %v866 = vunpack.c.h.b16 %v295
    %v867 = vunpack.c.l.b16 %v296
    %v868 = vunpack.c.h.b16 %v296
    %v869 = vunpack.c.l.b16 %v297
    %v870 = vunpack.c.h.b16 %v297
    %v871 = vunpack.c.l.b16 %v298
    %v872 = vunpack.c.h.b16 %v298
    %v873 = vunpack.c.l.b16 %v299
    %v874 = vunpack.c.h.b16 %v299
    %v875 = vunpack.c.l.b16 %v300
    %v876 = vunpack.c.h.b16 %v300
    %v877 = vunpack.c.l.b16 %v301
    %v878 = vunpack.c.h.b16 %v301
    %v879 = vunpack.c.l.b16 %v302
    %v880 = vunpack.c.h.b16 %v302
    %v881 = vunpack.c.l.b16 %v303
    %v882 = vunpack.c.h.b16 %v303
    %v883 = vunpack.c.l.b16 %v304
    %v884 = vunpack.c.h.b16 %v304
    %v885 = vunpack.c.l.b16 %v305
    %v886 = vunpack.c.h.b16 %v305
    %v887 = vunpack.c.l.b16 %v306
    %v888 = vunpack.c.h.b16 %v306
    %v889 = vunpack.c.l.b16 %v307
    %v890 = vunpack.c.h.b16 %v307
    %v891 = vunpack.c.l.b16 %v308
    %v892 = vunpack.c.h.b16 %v308
    %v893 = vunpack.c.l.b16 %v309
    %v894 = vunpack.c.h.b16 %v309
    %v895 = vunpack.c.l.b16 %v310
    %v896 = vunpack.c.h.b16 %v310
    %v897 = vunpack.c.l.b16 %v311
    %v898 = vunpack.c.h.b16 %v311
    %v899 = vunpack.c.l.b16 %v312
    %v900 = vunpack.c.h.b16 %v312
    %v901 = vunpack.c.l.b16 %v313
    %v902 = vunpack.c.h.b16 %v313
    %v903 = vunpack.c.l.b16 %v314
    %v904 = vunpack.c.h.b16 %v314
    %v905 = vunpack.c.l.b16 %v315
    %v906 = vunpack.c.h.b16 %v315
    %v907 = vunpack.c.l.b16 %v316
    %v908 = vunpack.c.h.b16 %v316
    %v909 = vunpack.c.l.b16 %v317
    %v910 = vunpack.c.h.b16 %v317
    %v911 = vunpack.c.l.b16 %v318
    %v912 = vunpack.c.h.b16 %v318
    %v913 = vunpack.c.l.b16 %v319
    %v914 = vunpack.c.h.b16 %v319
    %v915 = vunpack.c.l.b16 %v320
    %v916 = vunpack.c.h.b16 %v320
    %v917 = vunpack.c.l.b16 %v321
    %v918 = vunpack.c.h.b16 %v321
    %v919 = vunpack.c.l.b16 %v322
    %v920 = vunpack.c.h.b16 %v322
    %v921 = vunpack.c.l.b16 %v323
    %v922 = vunpack.c.h.b16 %v323
    %v923 = vunpack.c.l.b16 %v324
    %v924 = vunpack.c.h.b16 %v324
    %v925 = vunpack.c.l.b16 %v325
    %v926 = vunpack.c.h.b16 %v325
    %v927 = vunpack.c.l.b16 %v326
    %v928 = vunpack.c.h.b16 %v326
    %v929 = vunpack.c.l.b16 %v327
    %v930 = vunpack.c.h.b16 %v327
    %v931 = vunpack.c.l.b16 %v328
    %v932 = vunpack.c.h.b16 %v328
    %v933 = vunpack.c.l.b16 %v329
    %v934 = vunpack.c.h.b16 %v329
    %v935 = vunpack.c.l.b16 %v330
    %v936 = vunpack.c.h.b16 %v330
    %v937 = vunpack.c.l.b16 %v331
    %v938 = vunpack.c.h.b16 %v331
    %v939 = vunpack.c.l.b16 %v332
    %v940 = vunpack.c.h.b16 %v332
    %v941 = vpack.c.b16 %v569, %v557
    %v942 = vpack.c.b16 %v570, %v558
    %v943 = vpack.c.b16 %v571, %v559
    %v944 = vpack.c.b16 %v572, %v560
    %v945 = vpack.c.b16 %v573, %v561
    %v946 = vpack.c.b16 %v574, %v562
    %v947 = vpack.c.b16 %v575, %v563
    %v948 = vpack.c.b16 %v576, %v564
    %v949 = vpack.c.b16 %v577, %v565
    %v950 = vpack.c.b16 %v578, %v566
    %v951 = vpack.c.b16 %v579, %v567
    %v952 = vpack.c.b16 %v580, %v568
    %v953 = vpack.c.b16 %v593, %v581
    %v954 = vpack.c.b16 %v594, %v582
    %v955 = vpack.c.b16 %v595, %v583
    %v956 = vpack.c.b16 %v596, %v584
    %v957 = vpack.c.b16 %v597, %v585
    %v958 = vpack.c.b16 %v598, %v586
    %v959 = vpack.c.b16 %v599, %v587
    %v960 = vpack.c.b16 %v600, %v588
    %v961 = vpack.c.b16 %v601, %v589
    %v962 = vpack.c.b16 %v602, %v590
    %v963 = vpack.c.b16 %v603, %v591
    %v964 = vpack.c.b16 %v604, %v592
    %v965 = vpack.c.b16 %v617, %v605
    %v966 = vpack.c.b16 %v618, %v606
    %v967 = vpack.c.b16 %v619, %v607
    %v968 = vpack.c.b16 %v620, %v608
    %v969 = vpack.c.b16 %v621, %v609
    %v970 = vpack.c.b16 %v622, %v610
    %v971 = vpack.c.b16 %v623, %v611
    %v972 = vpack.c.b16 %v624, %v612
    %v973 = vpack.c.b16 %v625, %v613
    %v974 = vpack.c.b16 %v626, %v614
    %v975 = vpack.c.b16 %v627, %v615
    %v976 = vpack.c.b16 %v628, %v616
    %v977 = vpack.c.b16 %v641, %v629
    %v978 = vpack.c.b16 %v642, %v630
    %v979 = vpack.c.b16 %v643, %v631
    %v980 = vpack.c.b16 %v644, %v632
    %v981 = vpack.c.b16 %v645, %v633
    %v982 = vpack.c.b16 %v646, %v634
    %v983 = vpack.c.b16 %v647, %v635
    %v984 = vpack.c.b16 %v648, %v636
    %v985 = vpack.c.b16 %v649, %v637
    %v986 = vpack.c.b16 %v650, %v638
    %v987 = vpack.c.b16 %v651, %v639
    %v988 = vpack.c.b16 %v652, %v640
    %v989 = vpack.c.b16 %v665, %v653
    %v990 = vpack.c.b16 %v666, %v654
    %v991 = vpack.c.b16 %v667, %v655
    %v992 = vpack.c.b16 %v668, %v656
    %v993 = vpack.c.b16 %v669, %v657
    %v994 = vpack.c.b16 %v670, %v658
    %v995 = vpack.c.b16 %v671, %v659
    %v996 = vpack.c.b16 %v672, %v660
    %v997 = vpack.c.b16 %v673, %v661
    %v998 = vpack.c.b16 %v674, %v662
    %v999 = vpack.c.b16 %v675, %v663
    %v1000 = vpack.c.b16 %v676, %v664
    %v1001 = vpack.c.b16 %v689, %v677
    %v1002 = vpack.c.b16 %v690, %v678
    %v1003 = vpack.c.b16 %v691, %v679
    %v1004 = vpack.c.b16 %v692, %v680
    %v1005 = vpack.c.b16 %v693, %v681
    %v1006 = vpack.c.b16 %v694, %v682
    %v1007 = vpack.c.b16 %v695, %v683
    %v1008 = vpack.c.b16 %v696, %v684
    %v1009 = vpack.c.b16 %v697, %v685
    %v1010 = vpack.c.b16 %v698, %v686
    %v1011 = vpack.c.b16 %v699, %v687
    %v1012 = vpack.c.b16 %v700, %v688
    %v1013 = vpack.c.b16 %v713, %v701
    %v1014 = vpack.c.b16 %v714, %v702
    %v1015 = vpack.c.b16 %v715, %v703
    %v1016 = vpack.c.b16 %v716, %v704
    %v1017 = vpack.c.b16 %v717, %v705
    %v1018 = vpack.c.b16 %v718, %v706
    %v1019 = vpack.c.b16 %v719, %v707
    %v1020 = vpack.c.b16 %v720, %v708
    %v1021 = vpack.c.b16 %v721, %v709
    %v1022 = vpack.c.b16 %v722, %v710
    %v1023 = vpack.c.b16 %v723, %v711
    %v1024 = vpack.c.b16 %v724, %v712
    %v1025 = vpack.c.b16 %v737, %v725
    %v1026 = vpack.c.b16 %v738, %v726
    %v1027 = vpack.c.b16 %v739, %v727
    %v1028 = vpack.c.b16 %v740, %v728
    %v1029 = vpack.c.b16 %v741, %v729
    %v1030 = vpack.c.b16 %v742, %v730
    %v1031 = vpack.c.b16 %v743, %v731
    %v1032 = vpack.c.b16 %v744, %v732
    %v1033 = vpack.c.b16 %v745, %v733
    %v1034 = vpack.c.b16 %v746, %v734
    %v1035 = vpack.c.b16 %v747, %v735
    %v1036 = vpack.c.b16 %v748, %v736
    %v1037 = vpack.c.b16 %v761, %v749
    %v1038 = vpack.c.b16 %v762, %v750
    %v1039 = vpack.c.b16 %v763, %v751
    %v1040 = vpack.c.b16 %v764, %v752
    %v1041 = vpack.c.b16 %v765, %v753
    %v1042 = vpack.c.b16 %v766, %v754
    %v1043 = vpack.c.b16 %v767, %v755
    %v1044 = vpack.c.b16 %v768, %v756
    %v1045 = vpack.c.b16 %v769, %v757
    %v1046 = vpack.c.b16 %v770, %v758
    %v1047 = vpack.c.b16 %v771, %v759
    %v1048 = vpack.c.b16 %v772, %v760
    %v1049 = vpack.c.b16 %v785, %v773
    %v1050 = vpack.c.b16 %v786, %v774
    %v1051 = vpack.c.b16 %v787, %v775
    %v1052 = vpack.c.b16 %v788, %v776
    %v1053 = vpack.c.b16 %v789, %v777
    %v1054 = vpack.c.b16 %v790, %v778
    %v1055 = vpack.c.b16 %v791, %v779
    %v1056 = vpack.c.b16 %v792, %v780
    %v1057 = vpack.c.b16 %v793, %v781
    %v1058 = vpack.c.b16 %v794, %v782
    %v1059 = vpack.c.b16 %v795, %v783
    %v1060 = vpack.c.b16 %v796, %v784
    %v1061 = vpack.c.b16 %v809, %v797
    %v1062 = vpack.c.b16 %v810, %v798
    %v1063 = vpack.c.b16 %v811, %v799
    %v1064 = vpack.c.b16 %v812, %v800
    %v1065 = vpack.c.b16 %v813, %v801
    %v1066 = vpack.c.b16 %v814, %v802
    %v1067 = vpack.c.b16 %v815, %v803
    %v1068 = vpack.c.b16 %v816, %v804
    %v1069 = vpack.c.b16 %v817, %v805
    %v1070 = vpack.c.b16 %v818, %v806
    %v1071 = vpack.c.b16 %v819, %v807
    %v1072 = vpack.c.b16 %v820, %v808
    %v1073 = vpack.c.b16 %v833, %v821
    %v1074 = vpack.c.b16 %v834, %v822
    %v1075 = vpack.c.b16 %v835, %v823
    %v1076 = vpack.c.b16 %v836, %v824
    %v1077 = vpack.c.b16 %v837, %v825
    %v1078 = vpack.c.b16 %v838, %v826
    %v1079 = vpack.c.b16 %v839, %v827
    %v1080 = vpack.c.b16 %v840, %v828
    %v1081 = vpack.c.b16 %v841, %v829
    %v1082 = vpack.c.b16 %v842, %v830
    %v1083 = vpack.c.b16 %v843, %v831
    %v1084 = vpack.c.b16 %v844, %v832
    %v1085 = vpack.c.b16 %v857, %v845
    %v1086 = vpack.c.b16 %v858, %v846
    %v1087 = vpack.c.b16 %v859, %v847
    %v1088 = vpack.c.b16 %v860, %v848
    %v1089 = vpack.c.b16 %v861, %v849
    %v1090 = vpack.c.b16 %v862, %v850
    %v1091 = vpack.c.b16 %v863, %v851
    %v1092 = vpack.c.b16 %v864, %v852
    %v1093 = vpack.c.b16 %v865, %v853
    %v1094 = vpack.c.b16 %v866, %v854
    %v1095 = vpack.c.b16 %v867, %v855
    %v1096 = vpack.c.b16 %v868, %v856
    %v1097 = vpack.c.b16 %v881, %v869
    %v1098 = vpack.c.b16 %v882, %v870
    %v1099 = vpack.c.b16 %v883, %v871
    %v1100 = vpack.c.b16 %v884, %v872
    %v1101 = vpack.c.b16 %v885, %v873
    %v1102 = vpack.c.b16 %v886, %v874
    %v1103 = vpack.c.b16 %v887, %v875
    %v1104 = vpack.c.b16 %v888, %v876
    %v1105 = vpack.c.b16 %v889, %v877
    %v1106 = vpack.c.b16 %v890, %v878
    %v1107 = vpack.c.b16 %v891, %v879
    %v1108 = vpack.c.b16 %v892, %v880
    %v1109 = vpack.c.b16 %v905, %v893
    %v1110 = vpack.c.b16 %v906, %v894
    %v1111 = vpack.c.b16 %v907, %v895
    %v1112 = vpack.c.b16 %v908, %v896
    %v1113 = vpack.c.b16 %v909, %v897
    %v1114 = vpack.c.b16 %v910, %v898
    %v1115 = vpack.c.b16 %v911, %v899
    %v1116 = vpack.c.b16 %v912, %v900
    %v1117 = vpack.c.b16 %v913, %v901
    %v1118 = vpack.c.b16 %v914, %v902
    %v1119 = vpack.c.b16 %v915, %v903
    %v1120 = vpack.c.b16 %v916, %v904
    %v1121 = vpack.c.b16 %v929, %v917
    %v1122 = vpack.c.b16 %v930, %v918
    %v1123 = vpack.c.b16 %v931, %v919
    %v1124 = vpack.c.b16 %v932, %v920
    %v1125 = vpack.c.b16 %v933, %v921
    %v1126 = vpack.c.b16 %v934, %v922
    %v1127 = vpack.c.b16 %v935, %v923
    %v1128 = vpack.c.b16 %v936, %v924
    %v1129 = vpack.c.b16 %v937, %v925
    %v1130 = vpack.c.b16 %v938, %v926
    %v1131 = vpack.c.b16 %v939, %v927
    %v1132 = vpack.c.b16 %v940, %v928
    %1325 = vmatprep.subr.bf16.mxu0 %v942
    %1326 = vmatpush1.bf16.msra.mxu0 %v941
    %1327 = vmatprep.subr.bf16.mxu0 %v954
    %1328 = vmatpush1.bf16.msra.mxu0 %v953
    %1329 = vmatprep.subr.bf16.mxu0 %v966
    %1330 = vmatpush1.bf16.msra.mxu0 %v965
    %1331 = vmatprep.subr.bf16.mxu0 %v978
    %1332 = vmatpush1.bf16.msra.mxu0 %v977
    %1333 = vmatprep.subr.bf16.mxu0 %v990
    %1334 = vmatpush1.bf16.msra.mxu0 %v989
    %1335 = vmatprep.subr.bf16.mxu0 %v1002
    %1336 = vmatpush1.bf16.msra.mxu0 %v1001
    %1337 = vmatprep.subr.bf16.mxu0 %v1014
    %1338 = vmatpush1.bf16.msra.mxu0 %v1013
    %1339 = vmatprep.subr.bf16.mxu0 %v1026
    %1340 = vmatpush1.bf16.msra.mxu0 %v1025
    %1341 = vmatprep.subr.bf16.mxu0 %v1038
    %1342 = vmatpush1.bf16.msra.mxu0 %v1037
    %1343 = vmatprep.subr.bf16.mxu0 %v1050
    %1344 = vmatpush1.bf16.msra.mxu0 %v1049
    %1345 = vmatprep.subr.bf16.mxu0 %v1062
    %1346 = vmatpush1.bf16.msra.mxu0 %v1061
    %1347 = vmatprep.subr.bf16.mxu0 %v1074
    %1348 = vmatpush1.bf16.msra.mxu0 %v1073
    %1349 = vmatprep.subr.bf16.mxu0 %v1086
    %1350 = vmatpush1.bf16.msra.mxu0 %v1085
    %1351 = vmatprep.subr.bf16.mxu0 %v1098
    %1352 = vmatpush1.bf16.msra.mxu0 %v1097
    %1353 = vmatprep.subr.bf16.mxu0 %v1110
    %1354 = vmatpush1.bf16.msra.mxu0 %v1109
    %1355 = vmatprep.subr.bf16.mxu0 %v1122
    %1356 = vmatpush1.bf16.msra.mxu0 %v1121
    %1357 = vmatprep.mubr.bf16.mxu0 %v357
    %1358 = vmatmul.mubr.bf16.gmra.mrb[0].mxu0 %v341
    %v1359 = vpop.f32.mrb[0].mxu0
    %v1360 = vadd.f32 0.0, %v1359
    %v1361 = vpop.f32.mrb[0].mxu0
    %v1362 = vadd.f32 0.0, %v1361
    %v1363 = vpop.f32.mrb[0].mxu0
    %v1364 = vadd.f32 0.0, %v1363
    %v1365 = vpop.f32.mrb[0].mxu0
    %v1366 = vadd.f32 0.0, %v1365
    %1367 = vmatprep.mubr.bf16.mxu0 %v358
    %1368 = vmatmul.mubr.bf16.gmra.mrb[0].mxu0 %v342
    %v1369 = vpop.f32.mrb[0].mxu0
    %v1370 = vadd.f32 0.0, %v1369
    %v1371 = vpop.f32.mrb[0].mxu0
    %v1372 = vadd.f32 0.0, %v1371
    %v1373 = vpop.f32.mrb[0].mxu0
    %v1374 = vadd.f32 0.0, %v1373
    %v1375 = vpop.f32.mrb[0].mxu0
    %v1376 = vadd.f32 0.0, %v1375
    %1377 = vmatprep.mubr.bf16.mxu0 %v359
    %1378 = vmatmul.mubr.bf16.gmra.mrb[0].mxu0 %v343
    %v1379 = vpop.f32.mrb[0].mxu0
    %v1380 = vadd.f32 0.0, %v1379
    %v1381 = vpop.f32.mrb[0].mxu0
    %v1382 = vadd.f32 0.0, %v1381
    %v1383 = vpop.f32.mrb[0].mxu0
    %v1384 = vadd.f32 0.0, %v1383
    %v1385 = vpop.f32.mrb[0].mxu0
    %v1386 = vadd.f32 0.0, %v1385
    %1387 = vmatprep.mubr.bf16.mxu0 %v360
    %1388 = vmatmul.mubr.bf16.gmra.mrb[0].mxu0 %v344
    %v1389 = vpop.f32.mrb[0].mxu0
    %v1390 = vadd.f32 0.0, %v1389
    %v1391 = vpop.f32.mrb[0].mxu0
    %v1392 = vadd.f32 0.0, %v1391
    %v1393 = vpop.f32.mrb[0].mxu0
    %v1394 = vpop.f32.mrb[0].mxu0
    %1395 = vdwg.mxu0
    %1396 = vmatprep.subr.bf16.mxu0 %v944
    %1397 = vmatpush1.bf16.msra.mxu0 %v943
    %1398 = vmatprep.subr.bf16.mxu0 %v956
    %1399 = vmatpush1.bf16.msra.mxu0 %v955
    %1400 = vmatprep.subr.bf16.mxu0 %v968
    %1401 = vmatpush1.bf16.msra.mxu0 %v967
    %1402 = vmatprep.subr.bf16.mxu0 %v980
    %1403 = vmatpush1.bf16.msra.mxu0 %v979
    %1404 = vmatprep.subr.bf16.mxu0 %v992
    %1405 = vmatpush1.bf16.msra.mxu0 %v991
    %1406 = vmatprep.subr.bf16.mxu0 %v1004
    %1407 = vmatpush1.bf16.msra.mxu0 %v1003
    %1408 = vmatprep.subr.bf16.mxu0 %v1016
    %1409 = vmatpush1.bf16.msra.mxu0 %v1015
    %1410 = vmatprep.subr.bf16.mxu0 %v1028
    %1411 = vmatpush1.bf16.msra.mxu0 %v1027
    %1412 = vmatprep.subr.bf16.mxu0 %v1040
    %1413 = vmatpush1.bf16.msra.mxu0 %v1039
    %1414 = vmatprep.subr.bf16.mxu0 %v1052
    %1415 = vmatpush1.bf16.msra.mxu0 %v1051
    %1416 = vmatprep.subr.bf16.mxu0 %v1064
    %1417 = vmatpush1.bf16.msra.mxu0 %v1063
    %1418 = vmatprep.subr.bf16.mxu0 %v1076
    %1419 = vmatpush1.bf16.msra.mxu0 %v1075
    %1420 = vmatprep.subr.bf16.mxu0 %v1088
    %1421 = vmatpush1.bf16.msra.mxu0 %v1087
    %1422 = vmatprep.subr.bf16.mxu0 %v1100
    %1423 = vmatpush1.bf16.msra.mxu0 %v1099
    %1424 = vmatprep.subr.bf16.mxu0 %v1112
    %1425 = vmatpush1.bf16.msra.mxu0 %v1111
    %1426 = vmatprep.subr.bf16.mxu0 %v1124
    %1427 = vmatpush1.bf16.msra.mxu0 %v1123
    %1428 = vmatprep.mubr.bf16.mxu0 %v357
    %1429 = vmatmul.mubr.bf16.gmra.mrb[0].mxu0 %v341
    %v1430 = vpop.f32.mrb[0].mxu0
    %v1431 = vadd.f32 0.0, %v1430
    %v1432 = vpop.f32.mrb[0].mxu0
    %v1433 = vadd.f32 0.0, %v1432
    %v1434 = vpop.f32.mrb[0].mxu0
    %v1435 = vadd.f32 0.0, %v1434
    %v1436 = vpop.f32.mrb[0].mxu0
    %v1437 = vadd.f32 0.0, %v1436
    %1438 = vmatprep.mubr.bf16.mxu0 %v358
    %1439 = vmatmul.mubr.bf16.gmra.mrb[0].mxu0 %v342
    %v1440 = vpop.f32.mrb[0].mxu0
    %v1441 = vadd.f32 0.0, %v1440
    %v1442 = vpop.f32.mrb[0].mxu0
    %v1443 = vadd.f32 0.0, %v1442
    %v1444 = vpop.f32.mrb[0].mxu0
    %v1445 = vadd.f32 0.0, %v1444
    %v1446 = vpop.f32.mrb[0].mxu0
    %v1447 = vadd.f32 0.0, %v1446
    %1448 = vmatprep.mubr.bf16.mxu0 %v359
    %1449 = vmatmul.mubr.bf16.gmra.mrb[0].mxu0 %v343
    %v1450 = vpop.f32.mrb[0].mxu0
    %v1451 = vadd.f32 0.0, %v1450
    %v1452 = vpop.f32.mrb[0].mxu0
    %v1453 = vadd.f32 0.0, %v1452
    %v1454 = vpop.f32.mrb[0].mxu0
    %v1455 = vadd.f32 0.0, %v1454
    %v1456 = vpop.f32.mrb[0].mxu0
    %v1457 = vadd.f32 0.0, %v1456
    %1458 = vmatprep.mubr.bf16.mxu0 %v360
    %1459 = vmatmul.mubr.bf16.gmra.mrb[0].mxu0 %v344
    %v1460 = vpop.f32.mrb[0].mxu0
    %v1461 = vadd.f32 0.0, %v1460
    %v1462 = vpop.f32.mrb[0].mxu0
    %v1463 = vadd.f32 0.0, %v1462
    %v1464 = vpop.f32.mrb[0].mxu0
    %v1465 = vpop.f32.mrb[0].mxu0
    %1466 = vdwg.mxu0
    %1467 = vmatprep.subr.bf16.mxu0 %v946
    %1468 = vmatpush1.bf16.msra.mxu0 %v945
    %1469 = vmatprep.subr.bf16.mxu0 %v958
    %1470 = vmatpush1.bf16.msra.mxu0 %v957
    %1471 = vmatprep.subr.bf16.mxu0 %v970
    %1472 = vmatpush1.bf16.msra.mxu0 %v969
    %1473 = vmatprep.subr.bf16.mxu0 %v982
    %1474 = vmatpush1.bf16.msra.mxu0 %v981
    %1475 = vmatprep.subr.bf16.mxu0 %v994
    %1476 = vmatpush1.bf16.msra.mxu0 %v993
    %1477 = vmatprep.subr.bf16.mxu0 %v1006
    %1478 = vmatpush1.bf16.msra.mxu0 %v1005
    %1479 = vmatprep.subr.bf16.mxu0 %v1018
    %1480 = vmatpush1.bf16.msra.mxu0 %v1017
    %1481 = vmatprep.subr.bf16.mxu0 %v1030
    %1482 = vmatpush1.bf16.msra.mxu0 %v1029
    %1483 = vmatprep.subr.bf16.mxu0 %v1042
    %1484 = vmatpush1.bf16.msra.mxu0 %v1041
    %1485 = vmatprep.subr.bf16.mxu0 %v1054
    %1486 = vmatpush1.bf16.msra.mxu0 %v1053
    %1487 = vmatprep.subr.bf16.mxu0 %v1066
    %1488 = vmatpush1.bf16.msra.mxu0 %v1065
    %1489 = vmatprep.subr.bf16.mxu0 %v1078
    %1490 = vmatpush1.bf16.msra.mxu0 %v1077
    %1491 = vmatprep.subr.bf16.mxu0 %v1090
    %1492 = vmatpush1.bf16.msra.mxu0 %v1089
    %1493 = vmatprep.subr.bf16.mxu0 %v1102
    %1494 = vmatpush1.bf16.msra.mxu0 %v1101
    %1495 = vmatprep.subr.bf16.mxu0 %v1114
    %1496 = vmatpush1.bf16.msra.mxu0 %v1113
    %1497 = vmatprep.subr.bf16.mxu0 %v1126
    %1498 = vmatpush1.bf16.msra.mxu0 %v1125
    %1499 = vmatprep.mubr.bf16.mxu0 %v357
    %1500 = vmatmul.mubr.bf16.gmra.mrb[0].mxu0 %v341
    %v1501 = vpop.f32.mrb[0].mxu0
    %v1502 = vadd.f32 0.0, %v1501
    %v1503 = vpop.f32.mrb[0].mxu0
    %v1504 = vadd.f32 0.0, %v1503
    %v1505 = vpop.f32.mrb[0].mxu0
    %v1506 = vadd.f32 0.0, %v1505
    %v1507 = vpop.f32.mrb[0].mxu0
    %v1508 = vadd.f32 0.0, %v1507
    %1509 = vmatprep.mubr.bf16.mxu0 %v358
    %1510 = vmatmul.mubr.bf16.gmra.mrb[0].mxu0 %v342
    %v1511 = vpop.f32.mrb[0].mxu0
    %v1512 = vadd.f32 0.0, %v1511
    %v1513 = vpop.f32.mrb[0].mxu0
    %v1514 = vadd.f32 0.0, %v1513
    %v1515 = vpop.f32.mrb[0].mxu0
    %v1516 = vadd.f32 0.0, %v1515
    %v1517 = vpop.f32.mrb[0].mxu0
    %v1518 = vadd.f32 0.0, %v1517
    %1519 = vmatprep.mubr.bf16.mxu0 %v359
    %1520 = vmatmul.mubr.bf16.gmra.mrb[0].mxu0 %v343
    %v1521 = vpop.f32.mrb[0].mxu0
    %v1522 = vadd.f32 0.0, %v1521
    %v1523 = vpop.f32.mrb[0].mxu0
    %v1524 = vadd.f32 0.0, %v1523
    %v1525 = vpop.f32.mrb[0].mxu0
    %v1526 = vadd.f32 0.0, %v1525
    %v1527 = vpop.f32.mrb[0].mxu0
    %v1528 = vadd.f32 0.0, %v1527
    %1529 = vmatprep.mubr.bf16.mxu0 %v360
    %1530 = vmatmul.mubr.bf16.gmra.mrb[0].mxu0 %v344
    %v1531 = vpop.f32.mrb[0].mxu0
    %v1532 = vadd.f32 0.0, %v1531
    %v1533 = vpop.f32.mrb[0].mxu0
    %v1534 = vadd.f32 0.0, %v1533
    %v1535 = vpop.f32.mrb[0].mxu0
    %v1536 = vpop.f32.mrb[0].mxu0
    %1537 = vdwg.mxu0
    %1538 = vmatprep.subr.bf16.mxu0 %v948
    %1539 = vmatpush1.bf16.msra.mxu0 %v947
    %1540 = vmatprep.subr.bf16.mxu0 %v960
    %1541 = vmatpush1.bf16.msra.mxu0 %v959
    %1542 = vmatprep.subr.bf16.mxu0 %v972
    %1543 = vmatpush1.bf16.msra.mxu0 %v971
    %1544 = vmatprep.subr.bf16.mxu0 %v984
    %1545 = vmatpush1.bf16.msra.mxu0 %v983
    %1546 = vmatprep.subr.bf16.mxu0 %v996
    %1547 = vmatpush1.bf16.msra.mxu0 %v995
    %1548 = vmatprep.subr.bf16.mxu0 %v1008
    %1549 = vmatpush1.bf16.msra.mxu0 %v1007
    %1550 = vmatprep.subr.bf16.mxu0 %v1020
    %1551 = vmatpush1.bf16.msra.mxu0 %v1019
    %1552 = vmatprep.subr.bf16.mxu0 %v1032
    %1553 = vmatpush1.bf16.msra.mxu0 %v1031
    %1554 = vmatprep.subr.bf16.mxu0 %v1044
    %1555 = vmatpush1.bf16.msra.mxu0 %v1043
    %1556 = vmatprep.subr.bf16.mxu0 %v1056
    %1557 = vmatpush1.bf16.msra.mxu0 %v1055
    %1558 = vmatprep.subr.bf16.mxu0 %v1068
    %1559 = vmatpush1.bf16.msra.mxu0 %v1067
    %1560 = vmatprep.subr.bf16.mxu0 %v1080
    %1561 = vmatpush1.bf16.msra.mxu0 %v1079
    %1562 = vmatprep.subr.bf16.mxu0 %v1092
    %1563 = vmatpush1.bf16.msra.mxu0 %v1091
    %1564 = vmatprep.subr.bf16.mxu0 %v1104
    %1565 = vmatpush1.bf16.msra.mxu0 %v1103
    %1566 = vmatprep.subr.bf16.mxu0 %v1116
    %1567 = vmatpush1.bf16.msra.mxu0 %v1115
    %1568 = vmatprep.subr.bf16.mxu0 %v1128
    %1569 = vmatpush1.bf16.msra.mxu0 %v1127
    %1570 = vmatprep.mubr.bf16.mxu0 %v357
    %1571 = vmatmul.mubr.bf16.gmra.mrb[0].mxu0 %v341
    %v1572 = vpop.f32.mrb[0].mxu0
    %v1573 = vadd.f32 0.0, %v1572
    %v1574 = vpop.f32.mrb[0].mxu0
    %v1575 = vadd.f32 0.0, %v1574
    %v1576 = vpop.f32.mrb[0].mxu0
    %v1577 = vadd.f32 0.0, %v1576
    %v1578 = vpop.f32.mrb[0].mxu0
    %v1579 = vadd.f32 0.0, %v1578
    %1580 = vmatprep.mubr.bf16.mxu0 %v358
    %1581 = vmatmul.mubr.bf16.gmra.mrb[0].mxu0 %v342
    %v1582 = vpop.f32.mrb[0].mxu0
    %v1583 = vadd.f32 0.0, %v1582
    %v1584 = vpop.f32.mrb[0].mxu0
    %v1585 = vadd.f32 0.0, %v1584
    %v1586 = vpop.f32.mrb[0].mxu0
    %v1587 = vadd.f32 0.0, %v1586
    %v1588 = vpop.f32.mrb[0].mxu0
    %v1589 = vadd.f32 0.0, %v1588
    %1590 = vmatprep.mubr.bf16.mxu0 %v359
    %1591 = vmatmul.mubr.bf16.gmra.mrb[0].mxu0 %v343
    %v1592 = vpop.f32.mrb[0].mxu0
    %v1593 = vadd.f32 0.0, %v1592
    %v1594 = vpop.f32.mrb[0].mxu0
    %v1595 = vadd.f32 0.0, %v1594
    %v1596 = vpop.f32.mrb[0].mxu0
    %v1597 = vadd.f32 0.0, %v1596
    %v1598 = vpop.f32.mrb[0].mxu0
    %v1599 = vadd.f32 0.0, %v1598
    %1600 = vmatprep.mubr.bf16.mxu0 %v360
    %1601 = vmatmul.mubr.bf16.gmra.mrb[0].mxu0 %v344
    %v1602 = vpop.f32.mrb[0].mxu0
    %v1603 = vadd.f32 0.0, %v1602
    %v1604 = vpop.f32.mrb[0].mxu0
    %v1605 = vadd.f32 0.0, %v1604
    %v1606 = vpop.f32.mrb[0].mxu0
    %v1607 = vpop.f32.mrb[0].mxu0
    %1608 = vdwg.mxu0
    %1609 = vmatprep.subr.bf16.mxu0 %v950
    %1610 = vmatpush1.bf16.msra.mxu0 %v949
    %1611 = vmatprep.subr.bf16.mxu0 %v962
    %1612 = vmatpush1.bf16.msra.mxu0 %v961
    %1613 = vmatprep.subr.bf16.mxu0 %v974
    %1614 = vmatpush1.bf16.msra.mxu0 %v973
    %1615 = vmatprep.subr.bf16.mxu0 %v986
    %1616 = vmatpush1.bf16.msra.mxu0 %v985
    %1617 = vmatprep.subr.bf16.mxu0 %v998
    %1618 = vmatpush1.bf16.msra.mxu0 %v997
    %1619 = vmatprep.subr.bf16.mxu0 %v1010
    %1620 = vmatpush1.bf16.msra.mxu0 %v1009
    %1621 = vmatprep.subr.bf16.mxu0 %v1022
    %1622 = vmatpush1.bf16.msra.mxu0 %v1021
    %1623 = vmatprep.subr.bf16.mxu0 %v1034
    %1624 = vmatpush1.bf16.msra.mxu0 %v1033
    %1625 = vmatprep.subr.bf16.mxu0 %v1046
    %1626 = vmatpush1.bf16.msra.mxu0 %v1045
    %1627 = vmatprep.subr.bf16.mxu0 %v1058
    %1628 = vmatpush1.bf16.msra.mxu0 %v1057
    %1629 = vmatprep.subr.bf16.mxu0 %v1070
    %1630 = vmatpush1.bf16.msra.mxu0 %v1069
    %1631 = vmatprep.subr.bf16.mxu0 %v1082
    %1632 = vmatpush1.bf16.msra.mxu0 %v1081
    %1633 = vmatprep.subr.bf16.mxu0 %v1094
    %1634 = vmatpush1.bf16.msra.mxu0 %v1093
    %1635 = vmatprep.subr.bf16.mxu0 %v1106
    %1636 = vmatpush1.bf16.msra.mxu0 %v1105
    %1637 = vmatprep.subr.bf16.mxu0 %v1118
    %1638 = vmatpush1.bf16.msra.mxu0 %v1117
    %1639 = vmatprep.subr.bf16.mxu0 %v1130
    %1640 = vmatpush1.bf16.msra.mxu0 %v1129
    %1641 = vmatprep.mubr.bf16.mxu0 %v357
    %1642 = vmatmul.mubr.bf16.gmra.mrb[0].mxu0 %v341
    %v1643 = vpop.f32.mrb[0].mxu0
    %v1644 = vadd.f32 0.0, %v1643
    %v1645 = vpop.f32.mrb[0].mxu0
    %v1646 = vadd.f32 0.0, %v1645
    %v1647 = vpop.f32.mrb[0].mxu0
    %v1648 = vadd.f32 0.0, %v1647
    %v1649 = vpop.f32.mrb[0].mxu0
    %v1650 = vadd.f32 0.0, %v1649
    %1651 = vmatprep.mubr.bf16.mxu0 %v358
    %1652 = vmatmul.mubr.bf16.gmra.mrb[0].mxu0 %v342
    %v1653 = vpop.f32.mrb[0].mxu0
    %v1654 = vadd.f32 0.0, %v1653
    %v1655 = vpop.f32.mrb[0].mxu0
    %v1656 = vadd.f32 0.0, %v1655
    %v1657 = vpop.f32.mrb[0].mxu0
    %v1658 = vadd.f32 0.0, %v1657
    %v1659 = vpop.f32.mrb[0].mxu0
    %v1660 = vadd.f32 0.0, %v1659
    %1661 = vmatprep.mubr.bf16.mxu0 %v359
    %1662 = vmatmul.mubr.bf16.gmra.mrb[0].mxu0 %v343
    %v1663 = vpop.f32.mrb[0].mxu0
    %v1664 = vadd.f32 0.0, %v1663
    %v1665 = vpop.f32.mrb[0].mxu0
    %v1666 = vadd.f32 0.0, %v1665
    %v1667 = vpop.f32.mrb[0].mxu0
    %v1668 = vadd.f32 0.0, %v1667
    %v1669 = vpop.f32.mrb[0].mxu0
    %v1670 = vadd.f32 0.0, %v1669
    %1671 = vmatprep.mubr.bf16.mxu0 %v360
    %1672 = vmatmul.mubr.bf16.gmra.mrb[0].mxu0 %v344
    %v1673 = vpop.f32.mrb[0].mxu0
    %v1674 = vadd.f32 0.0, %v1673
    %v1675 = vpop.f32.mrb[0].mxu0
    %v1676 = vadd.f32 0.0, %v1675
    %v1677 = vpop.f32.mrb[0].mxu0
    %v1678 = vpop.f32.mrb[0].mxu0
    %1679 = vdwg.mxu0
    %1680 = vmatprep.subr.bf16.mxu0 %v952
    %1681 = vmatpush1.bf16.msra.mxu0 %v951
    %1682 = vmatprep.subr.bf16.mxu0 %v964
    %1683 = vmatpush1.bf16.msra.mxu0 %v963
    %1684 = vmatprep.subr.bf16.mxu0 %v976
    %1685 = vmatpush1.bf16.msra.mxu0 %v975
    %1686 = vmatprep.subr.bf16.mxu0 %v988
    %1687 = vmatpush1.bf16.msra.mxu0 %v987
    %1688 = vmatprep.subr.bf16.mxu0 %v1000
    %1689 = vmatpush1.bf16.msra.mxu0 %v999
    %1690 = vmatprep.subr.bf16.mxu0 %v1012
    %1691 = vmatpush1.bf16.msra.mxu0 %v1011
    %1692 = vmatprep.subr.bf16.mxu0 %v1024
    %1693 = vmatpush1.bf16.msra.mxu0 %v1023
    %1694 = vmatprep.subr.bf16.mxu0 %v1036
    %1695 = vmatpush1.bf16.msra.mxu0 %v1035
    %1696 = vmatprep.subr.bf16.mxu0 %v1048
    %1697 = vmatpush1.bf16.msra.mxu0 %v1047
    %1698 = vmatprep.subr.bf16.mxu0 %v1060
    %1699 = vmatpush1.bf16.msra.mxu0 %v1059
    %1700 = vmatprep.subr.bf16.mxu0 %v1072
    %1701 = vmatpush1.bf16.msra.mxu0 %v1071
    %1702 = vmatprep.subr.bf16.mxu0 %v1084
    %1703 = vmatpush1.bf16.msra.mxu0 %v1083
    %1704 = vmatprep.subr.bf16.mxu0 %v1096
    %1705 = vmatpush1.bf16.msra.mxu0 %v1095
    %1706 = vmatprep.subr.bf16.mxu0 %v1108
    %1707 = vmatpush1.bf16.msra.mxu0 %v1107
    %1708 = vmatprep.subr.bf16.mxu0 %v1120
    %1709 = vmatpush1.bf16.msra.mxu0 %v1119
    %1710 = vmatprep.subr.bf16.mxu0 %v1132
    %1711 = vmatpush1.bf16.msra.mxu0 %v1131
    %1712 = vmatprep.mubr.bf16.mxu0 %v357
    %1713 = vmatmul.mubr.bf16.gmra.mrb[0].mxu0 %v341
    %v1714 = vpop.f32.mrb[0].mxu0
    %v1715 = vadd.f32 0.0, %v1714
    %v1716 = vpop.f32.mrb[0].mxu0
    %v1717 = vadd.f32 0.0, %v1716
    %v1718 = vpop.f32.mrb[0].mxu0
    %v1719 = vadd.f32 0.0, %v1718
    %v1720 = vpop.f32.mrb[0].mxu0
    %v1721 = vadd.f32 0.0, %v1720
    %1722 = vmatprep.mubr.bf16.mxu0 %v358
    %1723 = vmatmul.mubr.bf16.gmra.mrb[0].mxu0 %v342
    %v1724 = vpop.f32.mrb[0].mxu0
    %v1725 = vadd.f32 0.0, %v1724
    %v1726 = vpop.f32.mrb[0].mxu0
    %v1727 = vadd.f32 0.0, %v1726
    %v1728 = vpop.f32.mrb[0].mxu0
    %v1729 = vadd.f32 0.0, %v1728
    %v1730 = vpop.f32.mrb[0].mxu0
    %v1731 = vadd.f32 0.0, %v1730
    %1732 = vmatprep.mubr.bf16.mxu0 %v359
    %1733 = vmatmul.mubr.bf16.gmra.mrb[0].mxu0 %v343
    %v1734 = vpop.f32.mrb[0].mxu0
    %v1735 = vadd.f32 0.0, %v1734
    %v1736 = vpop.f32.mrb[0].mxu0
    %v1737 = vadd.f32 0.0, %v1736
    %v1738 = vpop.f32.mrb[0].mxu0
    %v1739 = vadd.f32 0.0, %v1738
    %v1740 = vpop.f32.mrb[0].mxu0
    %v1741 = vadd.f32 0.0, %v1740
    %1742 = vmatprep.mubr.bf16.mxu0 %v360
    %1743 = vmatmul.mubr.bf16.gmra.mrb[0].mxu0 %v344
    %v1744 = vpop.f32.mrb[0].mxu0
    %v1745 = vadd.f32 0.0, %v1744
    %v1746 = vpop.f32.mrb[0].mxu0
    %v1747 = vadd.f32 0.0, %v1746
    %v1748 = vpop.f32.mrb[0].mxu0
    %v1749 = vpop.f32.mrb[0].mxu0
    %1750 = vdwg.mxu0
    %1751 = vst [vmem:[#allocation5] sm:$0xff] %v1360
    %1752 = vst [vmem:[#allocation5 + $0x8] sm:$0xff] %v1362
    %1753 = vst [vmem:[#allocation5 + $0x10] sm:$0xff] %v1431
    %1754 = vst [vmem:[#allocation5 + $0x18] sm:$0xff] %v1433
    %1755 = vst [vmem:[#allocation5 + $0x20] sm:$0xff] %v1502
    %1756 = vst [vmem:[#allocation5 + $0x28] sm:$0xff] %v1504
    %1757 = vst [vmem:[#allocation5 + $0x30] sm:$0xff] %v1573
    %1758 = vst [vmem:[#allocation5 + $0x38] sm:$0xff] %v1575
    %1759 = vst [vmem:[#allocation5 + $0x40] sm:$0xff] %v1644
    %1760 = vst [vmem:[#allocation5 + $0x48] sm:$0xff] %v1646
    %1761 = vst [vmem:[#allocation5 + $0x50] sm:$0xff] %v1715
    %1762 = vst [vmem:[#allocation5 + $0x58] sm:$0xff] %v1717
    %1763 = vst [vmem:[#allocation5 + $0x60] sm:$0xff] %v1364
    %1764 = vst [vmem:[#allocation5 + $0x68] sm:$0xff] %v1366
    %1765 = vst [vmem:[#allocation5 + $0x70] sm:$0xff] %v1435
    %1766 = vst [vmem:[#allocation5 + $0x78] sm:$0xff] %v1437
    %1767 = vst [vmem:[#allocation5 + $0x80] sm:$0xff] %v1506
    %1768 = vst [vmem:[#allocation5 + $0x88] sm:$0xff] %v1508
    %1769 = vst [vmem:[#allocation5 + $0x90] sm:$0xff] %v1577
    %1770 = vst [vmem:[#allocation5 + $0x98] sm:$0xff] %v1579
    %1771 = vst [vmem:[#allocation5 + $0xa0] sm:$0xff] %v1648
    %1772 = vst [vmem:[#allocation5 + $0xa8] sm:$0xff] %v1650
    %1773 = vst [vmem:[#allocation5 + $0xb0] sm:$0xff] %v1719
    %1774 = vst [vmem:[#allocation5 + $0xb8] sm:$0xff] %v1721
    %1775 = vst [vmem:[#allocation5 + $0xc0] sm:$0xff] %v1370
    %1776 = vst [vmem:[#allocation5 + $0xc8] sm:$0xff] %v1372
    %1777 = vst [vmem:[#allocation5 + $0xd0] sm:$0xff] %v1441
    %1778 = vst [vmem:[#allocation5 + $0xd8] sm:$0xff] %v1443
    %1779 = vst [vmem:[#allocation5 + $0xe0] sm:$0xff] %v1512
    %1780 = vst [vmem:[#allocation5 + $0xe8] sm:$0xff] %v1514
    %1781 = vst [vmem:[#allocation5 + $0xf0] sm:$0xff] %v1583
    %1782 = vst [vmem:[#allocation5 + $0xf8] sm:$0xff] %v1585
    %1783 = vst [vmem:[#allocation5 + $0x100] sm:$0xff] %v1654
    %1784 = vst [vmem:[#allocation5 + $0x108] sm:$0xff] %v1656
    %1785 = vst [vmem:[#allocation5 + $0x110] sm:$0xff] %v1725
    %1786 = vst [vmem:[#allocation5 + $0x118] sm:$0xff] %v1727
    %1787 = vst [vmem:[#allocation5 + $0x120] sm:$0xff] %v1374
    %1788 = vst [vmem:[#allocation5 + $0x128] sm:$0xff] %v1376
    %1789 = vst [vmem:[#allocation5 + $0x130] sm:$0xff] %v1445
    %1790 = vst [vmem:[#allocation5 + $0x138] sm:$0xff] %v1447
    %1791 = vst [vmem:[#allocation5 + $0x140] sm:$0xff] %v1516
    %1792 = vst [vmem:[#allocation5 + $0x148] sm:$0xff] %v1518
    %1793 = vst [vmem:[#allocation5 + $0x150] sm:$0xff] %v1587
    %1794 = vst [vmem:[#allocation5 + $0x158] sm:$0xff] %v1589
    %1795 = vst [vmem:[#allocation5 + $0x160] sm:$0xff] %v1658
    %1796 = vst [vmem:[#allocation5 + $0x168] sm:$0xff] %v1660
    %1797 = vst [vmem:[#allocation5 + $0x170] sm:$0xff] %v1729
    %1798 = vst [vmem:[#allocation5 + $0x178] sm:$0xff] %v1731
    %1799 = vst [vmem:[#allocation5 + $0x180] sm:$0xff] %v1380
    %1800 = vst [vmem:[#allocation5 + $0x188] sm:$0xff] %v1382
    %1801 = vst [vmem:[#allocation5 + $0x190] sm:$0xff] %v1451
    %1802 = vst [vmem:[#allocation5 + $0x198] sm:$0xff] %v1453
    %1803 = vst [vmem:[#allocation5 + $0x1a0] sm:$0xff] %v1522
    %1804 = vst [vmem:[#allocation5 + $0x1a8] sm:$0xff] %v1524
    %1805 = vst [vmem:[#allocation5 + $0x1b0] sm:$0xff] %v1593
    %1806 = vst [vmem:[#allocation5 + $0x1b8] sm:$0xff] %v1595
    %1807 = vst [vmem:[#allocation5 + $0x1c0] sm:$0xff] %v1664
    %1808 = vst [vmem:[#allocation5 + $0x1c8] sm:$0xff] %v1666
    %1809 = vst [vmem:[#allocation5 + $0x1d0] sm:$0xff] %v1735
    %1810 = vst [vmem:[#allocation5 + $0x1d8] sm:$0xff] %v1737
    %1811 = vst [vmem:[#allocation5 + $0x1e0] sm:$0xff] %v1384
    %1812 = vst [vmem:[#allocation5 + $0x1e8] sm:$0xff] %v1386
    %1813 = vst [vmem:[#allocation5 + $0x1f0] sm:$0xff] %v1455
    %1814 = vst [vmem:[#allocation5 + $0x1f8] sm:$0xff] %v1457
    %1815 = vst [vmem:[#allocation5 + $0x200] sm:$0xff] %v1526
    %1816 = vst [vmem:[#allocation5 + $0x208] sm:$0xff] %v1528
    %1817 = vst [vmem:[#allocation5 + $0x210] sm:$0xff] %v1597
    %1818 = vst [vmem:[#allocation5 + $0x218] sm:$0xff] %v1599
    %1819 = vst [vmem:[#allocation5 + $0x220] sm:$0xff] %v1668
    %1820 = vst [vmem:[#allocation5 + $0x228] sm:$0xff] %v1670
    %1821 = vst [vmem:[#allocation5 + $0x230] sm:$0xff] %v1739
    %1822 = vst [vmem:[#allocation5 + $0x238] sm:$0xff] %v1741
    %1823 = vst [vmem:[#allocation5 + $0x240] sm:$0x1] %v1390
    %1824 = vst [vmem:[#allocation5 + $0x248] sm:$0x1] %v1392
    %1825 = vst [vmem:[#allocation5 + $0x250] sm:$0x1] %v1461
    %1826 = vst [vmem:[#allocation5 + $0x258] sm:$0x1] %v1463
    %1827 = vst [vmem:[#allocation5 + $0x260] sm:$0x1] %v1532
    %1828 = vst [vmem:[#allocation5 + $0x268] sm:$0x1] %v1534
    %1829 = vst [vmem:[#allocation5 + $0x270] sm:$0x1] %v1603
    %1830 = vst [vmem:[#allocation5 + $0x278] sm:$0x1] %v1605
    %1831 = vst [vmem:[#allocation5 + $0x280] sm:$0x1] %v1674
    %1832 = vst [vmem:[#allocation5 + $0x288] sm:$0x1] %v1676
    %1833 = vst [vmem:[#allocation5 + $0x290] sm:$0x1] %v1745
    %1834 = vst [vmem:[#allocation5 + $0x298] sm:$0x1] %v1747
    // Predicated region
    $region18: #{tpu_custom_call.1} parent=1 // pred_check
      _
    $region19: #{tpu_custom_call.1} parent=1 // pred_check_branch
      %1836 = sbr.rel (0) target = $region21
    $region20: #{tpu_custom_call.1} parent=1 // pred_region
      %s1838 = ssub.s32 10752, 10752
      %1839 = vsyncadd [#allocation4], %s1838
      %s1840 = sshll.u32 [#allocation5], 4
      %s1841 = int_to_ptr.vmem [resolvable:$true] %s1840
      %1846 = dma.vmem_to_hbm [thread:$0]  %s1841, 10752, %s3, [#allocation4], 1536, 1536, 96
    $region21: #{tpu_custom_call.1} parent=1 // pred_fallthru
      _
    // Predicated region
    $region22: #{tpu_custom_call.1} parent=1 // pred_check
      _
    $region23: #{tpu_custom_call.1} parent=1 // pred_check_branch
      %1848 = sbr.rel (0) target = $region25
    $region24: #{tpu_custom_call.1} parent=1 // pred_region
      %1849 = dma.done [#allocation4], 10752
    $region25: #{tpu_custom_call.1} parent=1 // pred_fallthru
      _
    %1850 = vsyncpa [#allocation3], 1
    %1851 = vsyncpa [#allocation4], 1

</llo_original>
